<compile_context>
chip_gen: v7x
topology: tpu7x:2x2x1
jax: 0.10.0
libtpu: 0.0.40
codegen_flags: <defaults>
</compile_context>

<pallas_src>
import functools

import jax
import jax.numpy as jnp
import numpy as np
from jax.experimental import pallas as pl
from jax.experimental.pallas import tpu as pltpu  # noqa: F401  (TPU backend)


# ----------------------------------------------------------------------------
# Fused Pallas kernel: 2-layer LSTM recurrence + flat-view slice + Linear head
# ----------------------------------------------------------------------------
def _make_fused_kernel(T, S, H):
    G = 4 * H

    def kernel(x_ref, wih0_ref, whh0_ref, b0_ref, wih1_ref, whh1_ref, b1_ref,
               wl_ref, bl_ref, o_ref):
        # ---- prologue (hoisted out of the recurrence) ---------------------
        # Layer-0 input projection over ALL time steps in one matmul:
        # (T*S, F) @ (F, 4H) -> (T*S, 4H); b0 broadcast-added exactly once.
        xproj = (jnp.dot(x_ref[...], wih0_ref[...],
                         preferred_element_type=jnp.float32) + b0_ref[...])
        whh0 = whh0_ref[...]
        wih1 = wih1_ref[...]
        whh1 = whh1_ref[...]
        b1 = jnp.broadcast_to(b1_ref[...], (S, G))   # hoisted broadcast

        def gates_to_hc(gates, c_prev):
            # PyTorch gate order: i, f, g, o  (4H == 128 lanes at H=32)
            i = jax.nn.sigmoid(gates[:, 0 * H:1 * H])
            f = jax.nn.sigmoid(gates[:, 1 * H:2 * H])
            g = jnp.tanh(gates[:, 2 * H:3 * H])
            o = jax.nn.sigmoid(gates[:, 3 * H:4 * H])
            c_new = f * c_prev + i * g
            h_new = o * jnp.tanh(c_new)
            return h_new, c_new

        h0 = jnp.zeros((S, H), jnp.float32)
        c0 = jnp.zeros((S, H), jnp.float32)
        h1 = jnp.zeros((S, H), jnp.float32)
        c1 = jnp.zeros((S, H), jnp.float32)

        hs = []
        for t in range(T):                      # static unroll over time
            # layer 0: only the recurrent h @ W_hh matmul stays in the loop
            g0 = xproj[t * S:(t + 1) * S, :]
            if t > 0:                           # h0 == 0 at t == 0
                g0 = g0 + jnp.dot(h0, whh0,
                                  preferred_element_type=jnp.float32)
            h0, c0 = gates_to_hc(g0, c0)
            # layer 1 (input = this step's h0, recurrent on h1)
            g1 = jnp.dot(h0, wih1, preferred_element_type=jnp.float32) + b1
            if t > 0:                           # h1 == 0 at t == 0
                g1 = g1 + jnp.dot(h1, whh1,
                                  preferred_element_type=jnp.float32)
            h1, c1 = gates_to_hc(g1, c1)
            hs.append(h1)

        # ---- epilogue: lstm_out.view(seq_len, B, H)[-1] + Linear ----------
        # The flat reinterpret selects rows [(S-1)*T, S*T) of the row-major
        # (T*S, H) stack of layer-1 hidden states; for T <= S this lies
        # entirely within the final time step (trace-time decision).
        if T <= S:
            last = hs[-1][S - T:, :]                        # (T, H) == (B, H)
        else:
            last = jnp.concatenate(hs, axis=0)[(S - 1) * T:, :]

        o_ref[...] = (jnp.dot(last, wl_ref[...],
                              preferred_element_type=jnp.float32)
                      + bl_ref[...])

    return kernel


# ----------------------------------------------------------------------------
# Wrapper
# ----------------------------------------------------------------------------
@functools.partial(jax.jit, static_argnames=("seq_len", "n_hidden"))
def lstm_predictor_forward(sequences, params, seq_len, n_hidden):
    """Reproduces LSTMPredictor.forward (eval mode) with one pallas_call."""
    B = sequences.shape[0]
    # == sequences.view(B, seq_len, -1), flattened row-major to (T*S, F) so
    # the kernel gets a clean 2-D block for the hoisted layer-0 projection.
    x2d = sequences.reshape(B * seq_len, -1)
    kernel = _make_fused_kernel(B, seq_len, n_hidden)
    # No grid / no BlockSpecs: everything (x ~2 KB, weights ~90 KB) fits in
    # VMEM on every generation, so the whole arrays are single VMEM blocks.
    return pl.pallas_call(
        kernel,
        out_shape=jax.ShapeDtypeStruct((B, 2), jnp.float32),
    )(x2d, params["wih0"], params["whh0"], params["b0"],
      params["wih1"], params["whh1"], params["b1"],
      params["w_lin"], params["b_lin"])


# ----------------------------------------------------------------------------
# Pure-JAX reference (for correctness check)
# ----------------------------------------------------------------------------
def lstm_predictor_ref(sequences, params, seq_len, n_hidden):
    B = sequences.shape[0]
    H = n_hidden
    x = sequences.reshape(B, seq_len, -1)
    T, S, _ = x.shape

    def cell(x_in, h, c, w_ih, w_hh, b):
        g = x_in @ w_ih + h @ w_hh + b
        i = jax.nn.sigmoid(g[:, 0 * H:1 * H])
        f = jax.nn.sigmoid(g[:, 1 * H:2 * H])
        gg = jnp.tanh(g[:, 2 * H:3 * H])
        o = jax.nn.sigmoid(g[:, 3 * H:4 * H])
        c = f * c + i * gg
        h = o * jnp.tanh(c)
        return h, c

    h0 = jnp.zeros((S, H), jnp.float32)
    c0 = jnp.zeros((S, H), jnp.float32)
    h1 = jnp.zeros((S, H), jnp.float32)
    c1 = jnp.zeros((S, H), jnp.float32)
    outs = []
    for t in range(T):
        h0, c0 = cell(x[t], h0, c0, params["wih0"], params["whh0"],
                      params["b0"])
        h1, c1 = cell(h0, h1, c1, params["wih1"], params["whh1"],
                      params["b1"])
        outs.append(h1)
    lstm_out = jnp.stack(outs, axis=0)
    last = lstm_out.reshape(seq_len, B, H)[-1]
    return last @ params["w_lin"] + params["b_lin"]


# ----------------------------------------------------------------------------
# Deterministic parameter init + run
# ----------------------------------------------------------------------------
def init_params(key, n_features, n_hidden):
    H, F, G = n_hidden, n_features, 4 * n_hidden
    k = 1.0 / np.sqrt(H)
    keys = jax.random.split(key, 10)

    def u(kk, shape, bound):
        return jax.random.uniform(kk, shape, jnp.float32, -bound, bound)

    return {
        # layer 0 (input_size = F); weights pre-transposed to (in, 4H)
        "wih0": u(keys[0], (F, G), k),
        "whh0": u(keys[1], (H, G), k),
        "b0": u(keys[2], (1, G), k) + u(keys[3], (1, G), k),   # b_ih + b_hh
        # layer 1 (input_size = H)
        "wih1": u(keys[4], (H, G), k),
        "whh1": u(keys[5], (H, G), k),
        "b1": u(keys[6], (1, G), k) + u(keys[7], (1, G), k),   # b_ih + b_hh
        # linear head: (H, 2) + (1, 2)
        "w_lin": u(keys[8], (H, 2), k),
        "b_lin": u(keys[9], (1, 2), k),
    }


if __name__ == "__main__":
    # Small shapes implied by the module: batch=4, seq_len=8, n_features=16,
    # n_hidden=32, n_layers=2.
    B, SEQ_LEN, N_FEATURES, N_HIDDEN = 4, 8, 16, 32

    root = jax.random.PRNGKey(0)
    k_data, k_param = jax.random.split(root)
    sequences = jax.random.normal(k_data, (B, SEQ_LEN, N_FEATURES),
                                  dtype=jnp.float32)
    params = init_params(k_param, N_FEATURES, N_HIDDEN)

    y = lstm_predictor_forward(sequences, params, SEQ_LEN, N_HIDDEN)
    y = jax.block_until_ready(y)

    y_ref = lstm_predictor_ref(sequences, params, SEQ_LEN, N_HIDDEN)
    np.testing.assert_allclose(np.asarray(y), np.asarray(y_ref),
                               rtol=1e-3, atol=1e-3)
    assert y.shape == (B, 2)
    print("KERNEL_OK")
</pallas_src>

<mosaic_0001>
module attributes {stable_mosaic.version = 11 : i64} {
  func.func @kernel(%arg0: memref<32x16xf32, #tpu.memory_space<vmem>>, %arg1: memref<16x128xf32, #tpu.memory_space<vmem>>, %arg2: memref<32x128xf32, #tpu.memory_space<vmem>>, %arg3: memref<1x128xf32, #tpu.memory_space<vmem>>, %arg4: memref<32x128xf32, #tpu.memory_space<vmem>>, %arg5: memref<32x128xf32, #tpu.memory_space<vmem>>, %arg6: memref<1x128xf32, #tpu.memory_space<vmem>>, %arg7: memref<32x2xf32, #tpu.memory_space<vmem>>, %arg8: memref<1x2xf32, #tpu.memory_space<vmem>>, %arg9: memref<4x2xf32, #tpu.memory_space<vmem>>) attributes {dimension_semantics = [], scalar_prefetch = 0 : i64, scratch_operands = 0 : i64, tpu.core_type = #tpu.core_type<tc>} {
    %c0 = arith.constant 0 : index
    %c0_0 = arith.constant 0 : index
    %0 = vector.load %arg0[%c0, %c0_0] : memref<32x16xf32, #tpu.memory_space<vmem>>, vector<32x16xf32>
    %c0_1 = arith.constant 0 : index
    %c0_2 = arith.constant 0 : index
    %1 = vector.load %arg1[%c0_1, %c0_2] : memref<16x128xf32, #tpu.memory_space<vmem>>, vector<16x128xf32>
    %cst = arith.constant dense<0.000000e+00> : vector<32x128xf32>
    %2 = tpu.matmul %0, %1, %cst {dimension_numbers = #tpu.dot_dimension_numbers<[1], [0], [0], [1], [0, 0, 1, 1], [], []>} : vector<32x16xf32>, vector<16x128xf32>, vector<32x128xf32> -> vector<32x128xf32>
    %c0_3 = arith.constant 0 : index
    %c0_4 = arith.constant 0 : index
    %3 = vector.load %arg3[%c0_3, %c0_4] : memref<1x128xf32, #tpu.memory_space<vmem>>, vector<1x128xf32>
    %4 = vector.broadcast %3 : vector<1x128xf32> to vector<32x128xf32>
    %5 = arith.addf %2, %4 : vector<32x128xf32>
    %c0_5 = arith.constant 0 : index
    %c0_6 = arith.constant 0 : index
    %6 = vector.load %arg2[%c0_5, %c0_6] : memref<32x128xf32, #tpu.memory_space<vmem>>, vector<32x128xf32>
    %c0_7 = arith.constant 0 : index
    %c0_8 = arith.constant 0 : index
    %7 = vector.load %arg4[%c0_7, %c0_8] : memref<32x128xf32, #tpu.memory_space<vmem>>, vector<32x128xf32>
    %c0_9 = arith.constant 0 : index
    %c0_10 = arith.constant 0 : index
    %8 = vector.load %arg5[%c0_9, %c0_10] : memref<32x128xf32, #tpu.memory_space<vmem>>, vector<32x128xf32>
    %c0_11 = arith.constant 0 : index
    %c0_12 = arith.constant 0 : index
    %9 = vector.load %arg6[%c0_11, %c0_12] : memref<1x128xf32, #tpu.memory_space<vmem>>, vector<1x128xf32>
    %10 = vector.shape_cast %9 : vector<1x128xf32> to vector<1x128xf32>
    %11 = vector.broadcast %10 : vector<1x128xf32> to vector<8x128xf32>
    %cst_13 = arith.constant 0.000000e+00 : f32
    %12 = vector.broadcast %cst_13 : f32 to vector<8x32xf32>
    %cst_14 = arith.constant 0.000000e+00 : f32
    %13 = vector.broadcast %cst_14 : f32 to vector<8x32xf32>
    %14 = vector.extract_strided_slice %5 {offsets = [0, 0], sizes = [8, 128], strides = [1, 1]} : vector<32x128xf32> to vector<8x128xf32>
    %15 = vector.extract_strided_slice %14 {offsets = [0, 0], sizes = [8, 32], strides = [1, 1]} : vector<8x128xf32> to vector<8x32xf32>
    %16 = arith.negf %15 : vector<8x32xf32>
    %17 = math.exp %16 : vector<8x32xf32>
    %cst_15 = arith.constant 1.000000e+00 : f32
    %18 = vector.broadcast %cst_15 : f32 to vector<8x32xf32>
    %19 = arith.addf %18, %17 : vector<8x32xf32>
    %20 = arith.divf %18, %19 : vector<8x32xf32>
    %21 = vector.extract_strided_slice %14 {offsets = [0, 32], sizes = [8, 32], strides = [1, 1]} : vector<8x128xf32> to vector<8x32xf32>
    %22 = arith.negf %21 : vector<8x32xf32>
    %23 = math.exp %22 : vector<8x32xf32>
    %cst_16 = arith.constant 1.000000e+00 : f32
    %24 = vector.broadcast %cst_16 : f32 to vector<8x32xf32>
    %25 = arith.addf %24, %23 : vector<8x32xf32>
    %26 = arith.divf %24, %25 : vector<8x32xf32>
    %27 = vector.extract_strided_slice %14 {offsets = [0, 64], sizes = [8, 32], strides = [1, 1]} : vector<8x128xf32> to vector<8x32xf32>
    %28 = math.tanh %27 : vector<8x32xf32>
    %29 = vector.extract_strided_slice %14 {offsets = [0, 96], sizes = [8, 32], strides = [1, 1]} : vector<8x128xf32> to vector<8x32xf32>
    %30 = arith.negf %29 : vector<8x32xf32>
    %31 = math.exp %30 : vector<8x32xf32>
    %cst_17 = arith.constant 1.000000e+00 : f32
    %32 = vector.broadcast %cst_17 : f32 to vector<8x32xf32>
    %33 = arith.addf %32, %31 : vector<8x32xf32>
    %34 = arith.divf %32, %33 : vector<8x32xf32>
    %35 = arith.mulf %26, %12 : vector<8x32xf32>
    %36 = arith.mulf %20, %28 : vector<8x32xf32>
    %37 = arith.addf %35, %36 : vector<8x32xf32>
    %38 = math.tanh %37 : vector<8x32xf32>
    %39 = arith.mulf %34, %38 : vector<8x32xf32>
    %cst_18 = arith.constant dense<0.000000e+00> : vector<8x128xf32>
    %40 = tpu.matmul %39, %7, %cst_18 {dimension_numbers = #tpu.dot_dimension_numbers<[1], [0], [0], [1], [0, 0, 1, 1], [], []>} : vector<8x32xf32>, vector<32x128xf32>, vector<8x128xf32> -> vector<8x128xf32>
    %41 = arith.addf %40, %11 : vector<8x128xf32>
    %42 = vector.extract_strided_slice %41 {offsets = [0, 0], sizes = [8, 32], strides = [1, 1]} : vector<8x128xf32> to vector<8x32xf32>
    %43 = arith.negf %42 : vector<8x32xf32>
    %44 = math.exp %43 : vector<8x32xf32>
    %cst_19 = arith.constant 1.000000e+00 : f32
    %45 = vector.broadcast %cst_19 : f32 to vector<8x32xf32>
    %46 = arith.addf %45, %44 : vector<8x32xf32>
    %47 = arith.divf %45, %46 : vector<8x32xf32>
    %48 = vector.extract_strided_slice %41 {offsets = [0, 32], sizes = [8, 32], strides = [1, 1]} : vector<8x128xf32> to vector<8x32xf32>
    %49 = arith.negf %48 : vector<8x32xf32>
    %50 = math.exp %49 : vector<8x32xf32>
    %cst_20 = arith.constant 1.000000e+00 : f32
    %51 = vector.broadcast %cst_20 : f32 to vector<8x32xf32>
    %52 = arith.addf %51, %50 : vector<8x32xf32>
    %53 = arith.divf %51, %52 : vector<8x32xf32>
    %54 = vector.extract_strided_slice %41 {offsets = [0, 64], sizes = [8, 32], strides = [1, 1]} : vector<8x128xf32> to vector<8x32xf32>
    %55 = math.tanh %54 : vector<8x32xf32>
    %56 = vector.extract_strided_slice %41 {offsets = [0, 96], sizes = [8, 32], strides = [1, 1]} : vector<8x128xf32> to vector<8x32xf32>
    %57 = arith.negf %56 : vector<8x32xf32>
    %58 = math.exp %57 : vector<8x32xf32>
    %cst_21 = arith.constant 1.000000e+00 : f32
    %59 = vector.broadcast %cst_21 : f32 to vector<8x32xf32>
    %60 = arith.addf %59, %58 : vector<8x32xf32>
    %61 = arith.divf %59, %60 : vector<8x32xf32>
    %62 = arith.mulf %53, %13 : vector<8x32xf32>
    %63 = arith.mulf %47, %55 : vector<8x32xf32>
    %64 = arith.addf %62, %63 : vector<8x32xf32>
    %65 = math.tanh %64 : vector<8x32xf32>
    %66 = arith.mulf %61, %65 : vector<8x32xf32>
    %67 = vector.extract_strided_slice %5 {offsets = [8, 0], sizes = [8, 128], strides = [1, 1]} : vector<32x128xf32> to vector<8x128xf32>
    %cst_22 = arith.constant dense<0.000000e+00> : vector<8x128xf32>
    %68 = tpu.matmul %39, %6, %cst_22 {dimension_numbers = #tpu.dot_dimension_numbers<[1], [0], [0], [1], [0, 0, 1, 1], [], []>} : vector<8x32xf32>, vector<32x128xf32>, vector<8x128xf32> -> vector<8x128xf32>
    %69 = arith.addf %67, %68 : vector<8x128xf32>
    %70 = vector.extract_strided_slice %69 {offsets = [0, 0], sizes = [8, 32], strides = [1, 1]} : vector<8x128xf32> to vector<8x32xf32>
    %71 = arith.negf %70 : vector<8x32xf32>
    %72 = math.exp %71 : vector<8x32xf32>
    %cst_23 = arith.constant 1.000000e+00 : f32
    %73 = vector.broadcast %cst_23 : f32 to vector<8x32xf32>
    %74 = arith.addf %73, %72 : vector<8x32xf32>
    %75 = arith.divf %73, %74 : vector<8x32xf32>
    %76 = vector.extract_strided_slice %69 {offsets = [0, 32], sizes = [8, 32], strides = [1, 1]} : vector<8x128xf32> to vector<8x32xf32>
    %77 = arith.negf %76 : vector<8x32xf32>
    %78 = math.exp %77 : vector<8x32xf32>
    %cst_24 = arith.constant 1.000000e+00 : f32
    %79 = vector.broadcast %cst_24 : f32 to vector<8x32xf32>
    %80 = arith.addf %79, %78 : vector<8x32xf32>
    %81 = arith.divf %79, %80 : vector<8x32xf32>
    %82 = vector.extract_strided_slice %69 {offsets = [0, 64], sizes = [8, 32], strides = [1, 1]} : vector<8x128xf32> to vector<8x32xf32>
    %83 = math.tanh %82 : vector<8x32xf32>
    %84 = vector.extract_strided_slice %69 {offsets = [0, 96], sizes = [8, 32], strides = [1, 1]} : vector<8x128xf32> to vector<8x32xf32>
    %85 = arith.negf %84 : vector<8x32xf32>
    %86 = math.exp %85 : vector<8x32xf32>
    %cst_25 = arith.constant 1.000000e+00 : f32
    %87 = vector.broadcast %cst_25 : f32 to vector<8x32xf32>
    %88 = arith.addf %87, %86 : vector<8x32xf32>
    %89 = arith.divf %87, %88 : vector<8x32xf32>
    %90 = arith.mulf %81, %37 : vector<8x32xf32>
    %91 = arith.mulf %75, %83 : vector<8x32xf32>
    %92 = arith.addf %90, %91 : vector<8x32xf32>
    %93 = math.tanh %92 : vector<8x32xf32>
    %94 = arith.mulf %89, %93 : vector<8x32xf32>
    %cst_26 = arith.constant dense<0.000000e+00> : vector<8x128xf32>
    %95 = tpu.matmul %94, %7, %cst_26 {dimension_numbers = #tpu.dot_dimension_numbers<[1], [0], [0], [1], [0, 0, 1, 1], [], []>} : vector<8x32xf32>, vector<32x128xf32>, vector<8x128xf32> -> vector<8x128xf32>
    %96 = arith.addf %95, %11 : vector<8x128xf32>
    %cst_27 = arith.constant dense<0.000000e+00> : vector<8x128xf32>
    %97 = tpu.matmul %66, %8, %cst_27 {dimension_numbers = #tpu.dot_dimension_numbers<[1], [0], [0], [1], [0, 0, 1, 1], [], []>} : vector<8x32xf32>, vector<32x128xf32>, vector<8x128xf32> -> vector<8x128xf32>
    %98 = arith.addf %96, %97 : vector<8x128xf32>
    %99 = vector.extract_strided_slice %98 {offsets = [0, 0], sizes = [8, 32], strides = [1, 1]} : vector<8x128xf32> to vector<8x32xf32>
    %100 = arith.negf %99 : vector<8x32xf32>
    %101 = math.exp %100 : vector<8x32xf32>
    %cst_28 = arith.constant 1.000000e+00 : f32
    %102 = vector.broadcast %cst_28 : f32 to vector<8x32xf32>
    %103 = arith.addf %102, %101 : vector<8x32xf32>
    %104 = arith.divf %102, %103 : vector<8x32xf32>
    %105 = vector.extract_strided_slice %98 {offsets = [0, 32], sizes = [8, 32], strides = [1, 1]} : vector<8x128xf32> to vector<8x32xf32>
    %106 = arith.negf %105 : vector<8x32xf32>
    %107 = math.exp %106 : vector<8x32xf32>
    %cst_29 = arith.constant 1.000000e+00 : f32
    %108 = vector.broadcast %cst_29 : f32 to vector<8x32xf32>
    %109 = arith.addf %108, %107 : vector<8x32xf32>
    %110 = arith.divf %108, %109 : vector<8x32xf32>
    %111 = vector.extract_strided_slice %98 {offsets = [0, 64], sizes = [8, 32], strides = [1, 1]} : vector<8x128xf32> to vector<8x32xf32>
    %112 = math.tanh %111 : vector<8x32xf32>
    %113 = vector.extract_strided_slice %98 {offsets = [0, 96], sizes = [8, 32], strides = [1, 1]} : vector<8x128xf32> to vector<8x32xf32>
    %114 = arith.negf %113 : vector<8x32xf32>
    %115 = math.exp %114 : vector<8x32xf32>
    %cst_30 = arith.constant 1.000000e+00 : f32
    %116 = vector.broadcast %cst_30 : f32 to vector<8x32xf32>
    %117 = arith.addf %116, %115 : vector<8x32xf32>
    %118 = arith.divf %116, %117 : vector<8x32xf32>
    %119 = arith.mulf %110, %64 : vector<8x32xf32>
    %120 = arith.mulf %104, %112 : vector<8x32xf32>
    %121 = arith.addf %119, %120 : vector<8x32xf32>
    %122 = math.tanh %121 : vector<8x32xf32>
    %123 = arith.mulf %118, %122 : vector<8x32xf32>
    %124 = vector.extract_strided_slice %5 {offsets = [16, 0], sizes = [8, 128], strides = [1, 1]} : vector<32x128xf32> to vector<8x128xf32>
    %cst_31 = arith.constant dense<0.000000e+00> : vector<8x128xf32>
    %125 = tpu.matmul %94, %6, %cst_31 {dimension_numbers = #tpu.dot_dimension_numbers<[1], [0], [0], [1], [0, 0, 1, 1], [], []>} : vector<8x32xf32>, vector<32x128xf32>, vector<8x128xf32> -> vector<8x128xf32>
    %126 = arith.addf %124, %125 : vector<8x128xf32>
    %127 = vector.extract_strided_slice %126 {offsets = [0, 0], sizes = [8, 32], strides = [1, 1]} : vector<8x128xf32> to vector<8x32xf32>
    %128 = arith.negf %127 : vector<8x32xf32>
    %129 = math.exp %128 : vector<8x32xf32>
    %cst_32 = arith.constant 1.000000e+00 : f32
    %130 = vector.broadcast %cst_32 : f32 to vector<8x32xf32>
    %131 = arith.addf %130, %129 : vector<8x32xf32>
    %132 = arith.divf %130, %131 : vector<8x32xf32>
    %133 = vector.extract_strided_slice %126 {offsets = [0, 32], sizes = [8, 32], strides = [1, 1]} : vector<8x128xf32> to vector<8x32xf32>
    %134 = arith.negf %133 : vector<8x32xf32>
    %135 = math.exp %134 : vector<8x32xf32>
    %cst_33 = arith.constant 1.000000e+00 : f32
    %136 = vector.broadcast %cst_33 : f32 to vector<8x32xf32>
    %137 = arith.addf %136, %135 : vector<8x32xf32>
    %138 = arith.divf %136, %137 : vector<8x32xf32>
    %139 = vector.extract_strided_slice %126 {offsets = [0, 64], sizes = [8, 32], strides = [1, 1]} : vector<8x128xf32> to vector<8x32xf32>
    %140 = math.tanh %139 : vector<8x32xf32>
    %141 = vector.extract_strided_slice %126 {offsets = [0, 96], sizes = [8, 32], strides = [1, 1]} : vector<8x128xf32> to vector<8x32xf32>
    %142 = arith.negf %141 : vector<8x32xf32>
    %143 = math.exp %142 : vector<8x32xf32>
    %cst_34 = arith.constant 1.000000e+00 : f32
    %144 = vector.broadcast %cst_34 : f32 to vector<8x32xf32>
    %145 = arith.addf %144, %143 : vector<8x32xf32>
    %146 = arith.divf %144, %145 : vector<8x32xf32>
    %147 = arith.mulf %138, %92 : vector<8x32xf32>
    %148 = arith.mulf %132, %140 : vector<8x32xf32>
    %149 = arith.addf %147, %148 : vector<8x32xf32>
    %150 = math.tanh %149 : vector<8x32xf32>
    %151 = arith.mulf %146, %150 : vector<8x32xf32>
    %cst_35 = arith.constant dense<0.000000e+00> : vector<8x128xf32>
    %152 = tpu.matmul %151, %7, %cst_35 {dimension_numbers = #tpu.dot_dimension_numbers<[1], [0], [0], [1], [0, 0, 1, 1], [], []>} : vector<8x32xf32>, vector<32x128xf32>, vector<8x128xf32> -> vector<8x128xf32>
    %153 = arith.addf %152, %11 : vector<8x128xf32>
    %cst_36 = arith.constant dense<0.000000e+00> : vector<8x128xf32>
    %154 = tpu.matmul %123, %8, %cst_36 {dimension_numbers = #tpu.dot_dimension_numbers<[1], [0], [0], [1], [0, 0, 1, 1], [], []>} : vector<8x32xf32>, vector<32x128xf32>, vector<8x128xf32> -> vector<8x128xf32>
    %155 = arith.addf %153, %154 : vector<8x128xf32>
    %156 = vector.extract_strided_slice %155 {offsets = [0, 0], sizes = [8, 32], strides = [1, 1]} : vector<8x128xf32> to vector<8x32xf32>
    %157 = arith.negf %156 : vector<8x32xf32>
    %158 = math.exp %157 : vector<8x32xf32>
    %cst_37 = arith.constant 1.000000e+00 : f32
    %159 = vector.broadcast %cst_37 : f32 to vector<8x32xf32>
    %160 = arith.addf %159, %158 : vector<8x32xf32>
    %161 = arith.divf %159, %160 : vector<8x32xf32>
    %162 = vector.extract_strided_slice %155 {offsets = [0, 32], sizes = [8, 32], strides = [1, 1]} : vector<8x128xf32> to vector<8x32xf32>
    %163 = arith.negf %162 : vector<8x32xf32>
    %164 = math.exp %163 : vector<8x32xf32>
    %cst_38 = arith.constant 1.000000e+00 : f32
    %165 = vector.broadcast %cst_38 : f32 to vector<8x32xf32>
    %166 = arith.addf %165, %164 : vector<8x32xf32>
    %167 = arith.divf %165, %166 : vector<8x32xf32>
    %168 = vector.extract_strided_slice %155 {offsets = [0, 64], sizes = [8, 32], strides = [1, 1]} : vector<8x128xf32> to vector<8x32xf32>
    %169 = math.tanh %168 : vector<8x32xf32>
    %170 = vector.extract_strided_slice %155 {offsets = [0, 96], sizes = [8, 32], strides = [1, 1]} : vector<8x128xf32> to vector<8x32xf32>
    %171 = arith.negf %170 : vector<8x32xf32>
    %172 = math.exp %171 : vector<8x32xf32>
    %cst_39 = arith.constant 1.000000e+00 : f32
    %173 = vector.broadcast %cst_39 : f32 to vector<8x32xf32>
    %174 = arith.addf %173, %172 : vector<8x32xf32>
    %175 = arith.divf %173, %174 : vector<8x32xf32>
    %176 = arith.mulf %167, %121 : vector<8x32xf32>
    %177 = arith.mulf %161, %169 : vector<8x32xf32>
    %178 = arith.addf %176, %177 : vector<8x32xf32>
    %179 = math.tanh %178 : vector<8x32xf32>
    %180 = arith.mulf %175, %179 : vector<8x32xf32>
    %181 = vector.extract_strided_slice %5 {offsets = [24, 0], sizes = [8, 128], strides = [1, 1]} : vector<32x128xf32> to vector<8x128xf32>
    %cst_40 = arith.constant dense<0.000000e+00> : vector<8x128xf32>
    %182 = tpu.matmul %151, %6, %cst_40 {dimension_numbers = #tpu.dot_dimension_numbers<[1], [0], [0], [1], [0, 0, 1, 1], [], []>} : vector<8x32xf32>, vector<32x128xf32>, vector<8x128xf32> -> vector<8x128xf32>
    %183 = arith.addf %181, %182 : vector<8x128xf32>
    %184 = vector.extract_strided_slice %183 {offsets = [0, 0], sizes = [8, 32], strides = [1, 1]} : vector<8x128xf32> to vector<8x32xf32>
    %185 = arith.negf %184 : vector<8x32xf32>
    %186 = math.exp %185 : vector<8x32xf32>
    %cst_41 = arith.constant 1.000000e+00 : f32
    %187 = vector.broadcast %cst_41 : f32 to vector<8x32xf32>
    %188 = arith.addf %187, %186 : vector<8x32xf32>
    %189 = arith.divf %187, %188 : vector<8x32xf32>
    %190 = vector.extract_strided_slice %183 {offsets = [0, 32], sizes = [8, 32], strides = [1, 1]} : vector<8x128xf32> to vector<8x32xf32>
    %191 = arith.negf %190 : vector<8x32xf32>
    %192 = math.exp %191 : vector<8x32xf32>
    %cst_42 = arith.constant 1.000000e+00 : f32
    %193 = vector.broadcast %cst_42 : f32 to vector<8x32xf32>
    %194 = arith.addf %193, %192 : vector<8x32xf32>
    %195 = arith.divf %193, %194 : vector<8x32xf32>
    %196 = vector.extract_strided_slice %183 {offsets = [0, 64], sizes = [8, 32], strides = [1, 1]} : vector<8x128xf32> to vector<8x32xf32>
    %197 = math.tanh %196 : vector<8x32xf32>
    %198 = vector.extract_strided_slice %183 {offsets = [0, 96], sizes = [8, 32], strides = [1, 1]} : vector<8x128xf32> to vector<8x32xf32>
    %199 = arith.negf %198 : vector<8x32xf32>
    %200 = math.exp %199 : vector<8x32xf32>
    %cst_43 = arith.constant 1.000000e+00 : f32
    %201 = vector.broadcast %cst_43 : f32 to vector<8x32xf32>
    %202 = arith.addf %201, %200 : vector<8x32xf32>
    %203 = arith.divf %201, %202 : vector<8x32xf32>
    %204 = arith.mulf %195, %149 : vector<8x32xf32>
    %205 = arith.mulf %189, %197 : vector<8x32xf32>
    %206 = arith.addf %204, %205 : vector<8x32xf32>
    %207 = math.tanh %206 : vector<8x32xf32>
    %208 = arith.mulf %203, %207 : vector<8x32xf32>
    %cst_44 = arith.constant dense<0.000000e+00> : vector<8x128xf32>
    %209 = tpu.matmul %208, %7, %cst_44 {dimension_numbers = #tpu.dot_dimension_numbers<[1], [0], [0], [1], [0, 0, 1, 1], [], []>} : vector<8x32xf32>, vector<32x128xf32>, vector<8x128xf32> -> vector<8x128xf32>
    %210 = arith.addf %209, %11 : vector<8x128xf32>
    %cst_45 = arith.constant dense<0.000000e+00> : vector<8x128xf32>
    %211 = tpu.matmul %180, %8, %cst_45 {dimension_numbers = #tpu.dot_dimension_numbers<[1], [0], [0], [1], [0, 0, 1, 1], [], []>} : vector<8x32xf32>, vector<32x128xf32>, vector<8x128xf32> -> vector<8x128xf32>
    %212 = arith.addf %210, %211 : vector<8x128xf32>
    %213 = vector.extract_strided_slice %212 {offsets = [0, 0], sizes = [8, 32], strides = [1, 1]} : vector<8x128xf32> to vector<8x32xf32>
    %214 = arith.negf %213 : vector<8x32xf32>
    %215 = math.exp %214 : vector<8x32xf32>
    %cst_46 = arith.constant 1.000000e+00 : f32
    %216 = vector.broadcast %cst_46 : f32 to vector<8x32xf32>
    %217 = arith.addf %216, %215 : vector<8x32xf32>
    %218 = arith.divf %216, %217 : vector<8x32xf32>
    %219 = vector.extract_strided_slice %212 {offsets = [0, 32], sizes = [8, 32], strides = [1, 1]} : vector<8x128xf32> to vector<8x32xf32>
    %220 = arith.negf %219 : vector<8x32xf32>
    %221 = math.exp %220 : vector<8x32xf32>
    %cst_47 = arith.constant 1.000000e+00 : f32
    %222 = vector.broadcast %cst_47 : f32 to vector<8x32xf32>
    %223 = arith.addf %222, %221 : vector<8x32xf32>
    %224 = arith.divf %222, %223 : vector<8x32xf32>
    %225 = vector.extract_strided_slice %212 {offsets = [0, 64], sizes = [8, 32], strides = [1, 1]} : vector<8x128xf32> to vector<8x32xf32>
    %226 = math.tanh %225 : vector<8x32xf32>
    %227 = vector.extract_strided_slice %212 {offsets = [0, 96], sizes = [8, 32], strides = [1, 1]} : vector<8x128xf32> to vector<8x32xf32>
    %228 = arith.negf %227 : vector<8x32xf32>
    %229 = math.exp %228 : vector<8x32xf32>
    %cst_48 = arith.constant 1.000000e+00 : f32
    %230 = vector.broadcast %cst_48 : f32 to vector<8x32xf32>
    %231 = arith.addf %230, %229 : vector<8x32xf32>
    %232 = arith.divf %230, %231 : vector<8x32xf32>
    %233 = arith.mulf %224, %178 : vector<8x32xf32>
    %234 = arith.mulf %218, %226 : vector<8x32xf32>
    %235 = arith.addf %233, %234 : vector<8x32xf32>
    %236 = math.tanh %235 : vector<8x32xf32>
    %237 = arith.mulf %232, %236 : vector<8x32xf32>
    %238 = vector.extract_strided_slice %237 {offsets = [4, 0], sizes = [4, 32], strides = [1, 1]} : vector<8x32xf32> to vector<4x32xf32>
    %c0_49 = arith.constant 0 : index
    %c0_50 = arith.constant 0 : index
    %239 = vector.load %arg7[%c0_49, %c0_50] : memref<32x2xf32, #tpu.memory_space<vmem>>, vector<32x2xf32>
    %cst_51 = arith.constant dense<0.000000e+00> : vector<4x2xf32>
    %240 = tpu.matmul %238, %239, %cst_51 {dimension_numbers = #tpu.dot_dimension_numbers<[1], [0], [0], [1], [0, 0, 1, 1], [], []>} : vector<4x32xf32>, vector<32x2xf32>, vector<4x2xf32> -> vector<4x2xf32>
    %c0_52 = arith.constant 0 : index
    %c0_53 = arith.constant 0 : index
    %241 = vector.load %arg8[%c0_52, %c0_53] : memref<1x2xf32, #tpu.memory_space<vmem>>, vector<1x2xf32>
    %242 = vector.broadcast %241 : vector<1x2xf32> to vector<4x2xf32>
    %243 = arith.addf %240, %242 : vector<4x2xf32>
    %c0_54 = arith.constant 0 : index
    %c0_55 = arith.constant 0 : index
    %244 = vector.load %arg9[%c0_54, %c0_55] : memref<4x2xf32, #tpu.memory_space<vmem>>, vector<4x2xf32>
    tpu.vector_store %arg9[%c0_54, %c0_55], %243 {strides = array<i32>} : memref<4x2xf32, #tpu.memory_space<vmem>>, vector<4x2xf32>,
    return
  }
}

</mosaic_0001>

<llo_original>
// kernel: lstm_predictor_forward.1
$region0: #{lstm_predictor_forward.1}
  #allocation0 [shape = 'u32[]', space=smem, size = 0x4, offset = 0x4, fixed_abs, tag = 'smem constant byte address 0x4 - core index']
  #allocation1 [shape = 'u32[144,128]{1,0:T(1,128)}', space=vmem, size = 0x12000, scoped, tag = 'internal scratch']
  %s0 = inlined_call_operand.vmem [shape: f32[32,16], index: 0, kind: input, shape index: {}]
  %s1 = inlined_call_operand.hbm [shape: f32[16,128], index: 1, kind: input, shape index: {}]
  %s2 = inlined_call_operand.hbm [shape: f32[32,128], index: 2, kind: input, shape index: {}]
  %s3 = inlined_call_operand.hbm [shape: f32[1,128], index: 3, kind: input, shape index: {}]
  %s4 = inlined_call_operand.vmem [shape: f32[32,128], index: 4, kind: input, shape index: {}]
  %s5 = inlined_call_operand.hbm [shape: f32[32,128], index: 5, kind: input, shape index: {}]
  %s6 = inlined_call_operand.hbm [shape: f32[1,128], index: 6, kind: input, shape index: {}]
  %s7 = inlined_call_operand.vmem [shape: f32[32,2], index: 7, kind: input, shape index: {}]
  %s8 = inlined_call_operand.hbm [shape: f32[1,2], index: 8, kind: input, shape index: {}]
  %s9 = inlined_call_operand.vmem [shape: f32[4,2], index: 9, kind: output, shape index: {}]
  %s10 = sld [smem:[#allocation0]]
  $region70: #{lstm_predictor_forward.1} parent=0
    _
  %s12 = ssub.s32 1, %s10
  %s13 = scalar_select 0, %s12, %s10
  $region1: #{lstm_predictor_forward.1} parent=0
    #allocation2 [shape = 'u8[8192]{0}', space=vmem, size = 0x2000, scoped, tag = 'input window, operand 1, single buffered']
    #allocation3 [shape = 's32[1]{0}', space=sflag, size = 0x4, scoped, tag = 'scoped memory for lstm_predictor_forward.1']
    #allocation4 [shape = 'u8[16384]{0}', space=vmem, size = 0x4000, scoped, tag = 'input window, operand 2, single buffered']
    #allocation5 [shape = 's32[1]{0}', space=sflag, size = 0x4, scoped, tag = 'scoped memory for lstm_predictor_forward.1']
    #allocation6 [shape = 'u8[512]{0}', space=vmem, size = 0x400, scoped, tag = 'input window, operand 3, single buffered']
    #allocation7 [shape = 'u8[16384]{0}', space=vmem, size = 0x4000, scoped, tag = 'input window, operand 5, single buffered']
    #allocation8 [shape = 's32[1]{0}', space=sflag, size = 0x4, scoped, tag = 'scoped memory for lstm_predictor_forward.1']
    #allocation9 [shape = 'u8[512]{0}', space=vmem, size = 0x400, scoped, tag = 'input window, operand 6, single buffered']
    #allocation10 [shape = 'u8[512]{0}', space=vmem, size = 0x400, scoped, tag = 'input window, operand 8, single buffered']
    #allocation11 [shape = 's32[1]{0}', space=sflag, size = 0x4, scoped, tag = 'scoped memory for lstm_predictor_forward.1']
    %14 = vsyncpa [#allocation3], 0
    %15 = vsyncpa [#allocation5], 0
    %16 = vsyncpa [#allocation8], 0
    %17 = vsyncpa [#allocation11], 0
    // Predicated region
    $region2: #{lstm_predictor_forward.1} parent=1 // pred_check
      _
    $region3: #{lstm_predictor_forward.1} parent=1 // pred_check_branch
      %19 = sbr.rel (0) target = $region5
    $region4: #{lstm_predictor_forward.1} parent=1 // pred_region
      _
    $region5: #{lstm_predictor_forward.1} parent=1 // pred_fallthru
      _
    // Predicated region
    $region6: #{lstm_predictor_forward.1} parent=1 // pred_check
      _
    $region7: #{lstm_predictor_forward.1} parent=1 // pred_check_branch
      %21 = sbr.rel (0) target = $region9
    $region8: #{lstm_predictor_forward.1} parent=1 // pred_region
      %s23 = ssub.s32 256, 256
      %24 = vsyncadd [#allocation3], %s23
      %s25 = sshll.u32 [#allocation2], 4
      %s26 = int_to_ptr.vmem [resolvable:$true] %s25
      %31 = dma.hbm_to_vmem [thread:$0]  %s1, 256, %s26, [#allocation3], 128, 128, 8
    $region9: #{lstm_predictor_forward.1} parent=1 // pred_fallthru
      _
    // Predicated region
    $region10: #{lstm_predictor_forward.1} parent=1 // pred_check
      _
    $region11: #{lstm_predictor_forward.1} parent=1 // pred_check_branch
      %33 = sbr.rel (0) target = $region13
    $region12: #{lstm_predictor_forward.1} parent=1 // pred_region
      %s35 = ssub.s32 512, 512
      %36 = vsyncadd [#allocation5], %s35
      %s37 = sshll.u32 [#allocation4], 4
      %s38 = int_to_ptr.vmem [resolvable:$true] %s37
      %43 = dma.hbm_to_vmem [thread:$0]  %s2, 512, %s38, [#allocation5], 128, 128, 8
    $region13: #{lstm_predictor_forward.1} parent=1 // pred_fallthru
      _
    // Predicated region
    $region14: #{lstm_predictor_forward.1} parent=1 // pred_check
      _
    $region15: #{lstm_predictor_forward.1} parent=1 // pred_check_branch
      %45 = sbr.rel (0) target = $region17
    $region16: #{lstm_predictor_forward.1} parent=1 // pred_region
      %s47 = ssub.s32 16, 16
      %48 = vsyncadd [#allocation5], %s47
      %s50 = sshll.u32 [#allocation6], 4
      %s51 = int_to_ptr.vmem [resolvable:$true] %s50
      %53 = dma.hbm_to_vmem [thread:$0]  %s3, 16, %s51, [#allocation5]
    $region17: #{lstm_predictor_forward.1} parent=1 // pred_fallthru
      _
    // Predicated region
    $region18: #{lstm_predictor_forward.1} parent=1 // pred_check
      _
    $region19: #{lstm_predictor_forward.1} parent=1 // pred_check_branch
      %55 = sbr.rel (0) target = $region21
    $region20: #{lstm_predictor_forward.1} parent=1 // pred_region
      _
    $region21: #{lstm_predictor_forward.1} parent=1 // pred_fallthru
      _
    // Predicated region
    $region22: #{lstm_predictor_forward.1} parent=1 // pred_check
      _
    $region23: #{lstm_predictor_forward.1} parent=1 // pred_check_branch
      %57 = sbr.rel (0) target = $region25
    $region24: #{lstm_predictor_forward.1} parent=1 // pred_region
      %s59 = ssub.s32 512, 512
      %60 = vsyncadd [#allocation8], %s59
      %s61 = sshll.u32 [#allocation7], 4
      %s62 = int_to_ptr.vmem [resolvable:$true] %s61
      %67 = dma.hbm_to_vmem [thread:$0]  %s5, 512, %s62, [#allocation8], 128, 128, 8
    $region25: #{lstm_predictor_forward.1} parent=1 // pred_fallthru
      _
    // Predicated region
    $region26: #{lstm_predictor_forward.1} parent=1 // pred_check
      _
    $region27: #{lstm_predictor_forward.1} parent=1 // pred_check_branch
      %69 = sbr.rel (0) target = $region29
    $region28: #{lstm_predictor_forward.1} parent=1 // pred_region
      %s71 = ssub.s32 16, 16
      %72 = vsyncadd [#allocation8], %s71
      %s74 = sshll.u32 [#allocation9], 4
      %s75 = int_to_ptr.vmem [resolvable:$true] %s74
      %77 = dma.hbm_to_vmem [thread:$0]  %s6, 16, %s75, [#allocation8]
    $region29: #{lstm_predictor_forward.1} parent=1 // pred_fallthru
      _
    // Predicated region
    $region30: #{lstm_predictor_forward.1} parent=1 // pred_check
      _
    $region31: #{lstm_predictor_forward.1} parent=1 // pred_check_branch
      %79 = sbr.rel (0) target = $region33
    $region32: #{lstm_predictor_forward.1} parent=1 // pred_region
      _
    $region33: #{lstm_predictor_forward.1} parent=1 // pred_fallthru
      _
    // Predicated region
    $region34: #{lstm_predictor_forward.1} parent=1 // pred_check
      _
    $region35: #{lstm_predictor_forward.1} parent=1 // pred_check_branch
      %81 = sbr.rel (0) target = $region37
    $region36: #{lstm_predictor_forward.1} parent=1 // pred_region
      %s83 = ssub.s32 16, 16
      %84 = vsyncadd [#allocation11], %s83
      %s86 = sshll.u32 [#allocation10], 4
      %s87 = int_to_ptr.vmem [resolvable:$true] %s86
      %89 = dma.hbm_to_vmem [thread:$0]  %s8, 16, %s87, [#allocation11]
    $region37: #{lstm_predictor_forward.1} parent=1 // pred_fallthru
      _
    // Predicated region
    $region38: #{lstm_predictor_forward.1} parent=1 // pred_check
      _
    $region39: #{lstm_predictor_forward.1} parent=1 // pred_check_branch
      %91 = sbr.rel (0) target = $region41
    $region40: #{lstm_predictor_forward.1} parent=1 // pred_region
      %92 = dma.done [#allocation3], 256
    $region41: #{lstm_predictor_forward.1} parent=1 // pred_fallthru
      _
    // Predicated region
    $region42: #{lstm_predictor_forward.1} parent=1 // pred_check
      _
    $region43: #{lstm_predictor_forward.1} parent=1 // pred_check_branch
      %94 = sbr.rel (0) target = $region45
    $region44: #{lstm_predictor_forward.1} parent=1 // pred_region
      %95 = dma.done [#allocation5], 512
    $region45: #{lstm_predictor_forward.1} parent=1 // pred_fallthru
      _
    // Predicated region
    $region46: #{lstm_predictor_forward.1} parent=1 // pred_check
      _
    $region47: #{lstm_predictor_forward.1} parent=1 // pred_check_branch
      %97 = sbr.rel (0) target = $region49
    $region48: #{lstm_predictor_forward.1} parent=1 // pred_region
      %98 = dma.done [#allocation5], 16
    $region49: #{lstm_predictor_forward.1} parent=1 // pred_fallthru
      _
    // Predicated region
    $region50: #{lstm_predictor_forward.1} parent=1 // pred_check
      _
    $region51: #{lstm_predictor_forward.1} parent=1 // pred_check_branch
      %100 = sbr.rel (0) target = $region53
    $region52: #{lstm_predictor_forward.1} parent=1 // pred_region
      %101 = dma.done [#allocation8], 512
    $region53: #{lstm_predictor_forward.1} parent=1 // pred_fallthru
      _
    // Predicated region
    $region54: #{lstm_predictor_forward.1} parent=1 // pred_check
      _
    $region55: #{lstm_predictor_forward.1} parent=1 // pred_check_branch
      %103 = sbr.rel (0) target = $region57
    $region56: #{lstm_predictor_forward.1} parent=1 // pred_region
      %104 = dma.done [#allocation8], 16
    $region57: #{lstm_predictor_forward.1} parent=1 // pred_fallthru
      _
    // Predicated region
    $region58: #{lstm_predictor_forward.1} parent=1 // pred_check
      _
    $region59: #{lstm_predictor_forward.1} parent=1 // pred_check_branch
      %106 = sbr.rel (0) target = $region61
    $region60: #{lstm_predictor_forward.1} parent=1 // pred_region
      %107 = dma.done [#allocation11], 16
    $region61: #{lstm_predictor_forward.1} parent=1 // pred_fallthru
      _
    %v108 = vld [vmem:[%s0] sm:$0xff]
    %v109 = vld [vmem:[%s0 + $0x8] sm:$0xff]
    %v110 = vld [vmem:[%s0 + $0x10] sm:$0xff]
    %v111 = vld [vmem:[%s0 + $0x18] sm:$0xff]
    %v112 = vld [vmem:[#allocation2] sm:$0xff]
    %v113 = vld [vmem:[#allocation2 + $0x8] sm:$0xff]
    %v114 = vld [vmem:[#allocation6] sm:$0x1]
    %v116 = vlaneseq
    %v117 = vshrl.u32 %v116, 7
    %v118 = vsub.s32 0, %v117
    %v119 = vrot.slane %v114, %v118
    %vm121 = vcmask 130048
    %v123 = vsel %vm121, %v108, 0
    %v126 = vsel %vm121, %v109, 0
    %v129 = vsel %vm121, %v110, 0
    %v132 = vsel %vm121, %v111, 0
    %134 = vmatprep.subr.mxu0 0.0
    %135 = vmatpush1.msra.mxu0 %v112
    %136 = vmatprep.subr.mxu0 0.0
    %137 = vmatpush1.msra.mxu0 %v113
    %138 = vmatprep.subr.mxu0 0.0
    %139 = vmatpush1.msra.mxu0 0.0
    %140 = vmatprep.subr.mxu0 0.0
    %141 = vmatpush1.msra.mxu0 0.0
    %142 = vmatprep.subr.mxu0 0.0
    %143 = vmatpush1.msra.mxu0 0.0
    %144 = vmatprep.subr.mxu0 0.0
    %145 = vmatpush1.msra.mxu0 0.0
    %146 = vmatprep.subr.mxu0 0.0
    %147 = vmatpush1.msra.mxu0 0.0
    %148 = vmatprep.subr.mxu0 0.0
    %149 = vmatpush1.msra.mxu0 0.0
    %150 = vmatprep.subr.mxu0 0.0
    %151 = vmatpush1.msra.mxu0 0.0
    %152 = vmatprep.subr.mxu0 0.0
    %153 = vmatpush1.msra.mxu0 0.0
    %154 = vmatprep.subr.mxu0 0.0
    %155 = vmatpush1.msra.mxu0 0.0
    %156 = vmatprep.subr.mxu0 0.0
    %157 = vmatpush1.msra.mxu0 0.0
    %158 = vmatprep.subr.mxu0 0.0
    %159 = vmatpush1.msra.mxu0 0.0
    %160 = vmatprep.subr.mxu0 0.0
    %161 = vmatpush1.msra.mxu0 0.0
    %162 = vmatprep.subr.mxu0 0.0
    %163 = vmatpush1.msra.mxu0 0.0
    %164 = vmatprep.subr.mxu0 0.0
    %165 = vmatpush1.msra.mxu0 0.0
    %166 = vmatprep.subr.mxu0 0.0
    %167 = vmatpush1.msra.mxu0 0.0
    %168 = vmatprep.subr.mxu0 0.0
    %169 = vmatpush1.msra.mxu0 0.0
    %170 = vmatprep.subr.mxu0 0.0
    %171 = vmatpush1.msra.mxu0 0.0
    %172 = vmatprep.subr.mxu0 0.0
    %173 = vmatpush1.msra.mxu0 0.0
    %174 = vmatprep.subr.mxu0 0.0
    %175 = vmatpush1.msra.mxu0 0.0
    %176 = vmatprep.subr.mxu0 0.0
    %177 = vmatpush1.msra.mxu0 0.0
    %178 = vmatprep.subr.mxu0 0.0
    %179 = vmatpush1.msra.mxu0 0.0
    %180 = vmatprep.subr.mxu0 0.0
    %181 = vmatpush1.msra.mxu0 0.0
    %182 = vmatprep.subr.mxu0 0.0
    %183 = vmatpush1.msra.mxu0 0.0
    %184 = vmatprep.subr.mxu0 0.0
    %185 = vmatpush1.msra.mxu0 0.0
    %186 = vmatprep.subr.mxu0 0.0
    %187 = vmatpush1.msra.mxu0 0.0
    %188 = vmatprep.subr.mxu0 0.0
    %189 = vmatpush1.msra.mxu0 0.0
    %190 = vmatprep.subr.mxu0 0.0
    %191 = vmatpush1.msra.mxu0 0.0
    %192 = vmatprep.subr.mxu0 0.0
    %193 = vmatpush1.msra.mxu0 0.0
    %194 = vmatprep.subr.mxu0 0.0
    %195 = vmatpush1.msra.mxu0 0.0
    %196 = vmatprep.subr.mxu0 0.0
    %197 = vmatpush1.msra.mxu0 0.0
    %198 = vmatprep.mubr.f32.mxu0 0.0
    %199 = vmatmul.mubr.f32.gmra.mrb[0].mxu0 %v123
    %v200 = vpop.f32.mrb[0].mxu0
    %v201 = vadd.f32 %v119, %v200
    %v202 = vpop.f32.mrb[0].mxu0
    %203 = vmatprep.mubr.f32.mxu0 0.0
    %204 = vmatmul.mubr.f32.gmra.mrb[0].mxu0 %v126
    %v205 = vpop.f32.mrb[0].mxu0
    %v206 = vadd.f32 %v119, %v205
    %v207 = vpop.f32.mrb[0].mxu0
    %208 = vmatprep.mubr.f32.mxu0 0.0
    %209 = vmatmul.mubr.f32.gmra.mrb[0].mxu0 %v129
    %v210 = vpop.f32.mrb[0].mxu0
    %v211 = vadd.f32 %v119, %v210
    %v212 = vpop.f32.mrb[0].mxu0
    %213 = vmatprep.mubr.f32.mxu0 0.0
    %214 = vmatmul.mubr.f32.gmra.mrb[0].mxu0 %v132
    %v215 = vpop.f32.mrb[0].mxu0
    %v216 = vadd.f32 %v119, %v215
    %v217 = vpop.f32.mrb[0].mxu0
    %218 = vdwg.mxu0
    %v219 = vld [vmem:[#allocation4] sm:$0xff]
    %v220 = vld [vmem:[#allocation4 + $0x8] sm:$0xff]
    %v221 = vld [vmem:[#allocation4 + $0x10] sm:$0xff]
    %v222 = vld [vmem:[#allocation4 + $0x18] sm:$0xff]
    %v223 = vld [vmem:[%s4] sm:$0xff]
    %v224 = vld [vmem:[%s4 + $0x8] sm:$0xff]
    %v225 = vld [vmem:[%s4 + $0x10] sm:$0xff]
    %v226 = vld [vmem:[%s4 + $0x18] sm:$0xff]
    %v227 = vld [vmem:[#allocation7] sm:$0xff]
    %v228 = vld [vmem:[#allocation7 + $0x8] sm:$0xff]
    %v229 = vld [vmem:[#allocation7 + $0x10] sm:$0xff]
    %v230 = vld [vmem:[#allocation7 + $0x18] sm:$0xff]
    %v231 = vld [vmem:[#allocation9] sm:$0x1]
    %v233 = vlaneseq
    %v234 = vshrl.u32 %v233, 7
    %v235 = vsub.s32 0, %v234
    %v236 = vrot.slane %v231, %v235
    %v238 = vxor.u32 %v201, 2147483648
    %v239 = vmul.f32 %v238, 1.442695
    %v240 = vpow.pop %v239
    %v241 = vadd.f32 %v240, 1.0
    %v242 = vrcp.pop %v241
    %v243 = vmul.f32 1.0, %v242
    %v244 = vtanh.pop %v201
    %v245 = vmul.f32 %v243, 0.0
    %247 = vrot.lane.b32.xlu0 %v244, 64
    %v248 = vpop.permute.xlu0 %247
    %v250 = vmul.f32 %v243, %v248
    %252 = vrot.lane.b32.xlu0 %v250, 32
    %v253 = vpop.permute.xlu0 %252
    %v255 = vadd.f32 %v245, %v253
    %v256 = vtanh.pop %v255
    %258 = vrot.lane.b32.xlu0 %v256, 64
    %v259 = vpop.permute.xlu0 %258
    %v261 = vmul.f32 %v243, %v259
    %263 = vrot.lane.b32.xlu0 %v261, 32
    %v264 = vpop.permute.xlu0 %263
    %vm265 = vcmask 261120
    %v266 = vsel %vm265, %v264, 0
    %268 = vmatprep.subr.mxu0 0.0
    %269 = vmatpush1.msra.mxu0 %v223
    %270 = vmatprep.subr.mxu0 0.0
    %271 = vmatpush1.msra.mxu0 %v224
    %272 = vmatprep.subr.mxu0 0.0
    %273 = vmatpush1.msra.mxu0 %v225
    %274 = vmatprep.subr.mxu0 0.0
    %275 = vmatpush1.msra.mxu0 %v226
    %276 = vmatprep.subr.mxu0 0.0
    %277 = vmatpush1.msra.mxu0 0.0
    %278 = vmatprep.subr.mxu0 0.0
    %279 = vmatpush1.msra.mxu0 0.0
    %280 = vmatprep.subr.mxu0 0.0
    %281 = vmatpush1.msra.mxu0 0.0
    %282 = vmatprep.subr.mxu0 0.0
    %283 = vmatpush1.msra.mxu0 0.0
    %284 = vmatprep.subr.mxu0 0.0
    %285 = vmatpush1.msra.mxu0 0.0
    %286 = vmatprep.subr.mxu0 0.0
    %287 = vmatpush1.msra.mxu0 0.0
    %288 = vmatprep.subr.mxu0 0.0
    %289 = vmatpush1.msra.mxu0 0.0
    %290 = vmatprep.subr.mxu0 0.0
    %291 = vmatpush1.msra.mxu0 0.0
    %292 = vmatprep.subr.mxu0 0.0
    %293 = vmatpush1.msra.mxu0 0.0
    %294 = vmatprep.subr.mxu0 0.0
    %295 = vmatpush1.msra.mxu0 0.0
    %296 = vmatprep.subr.mxu0 0.0
    %297 = vmatpush1.msra.mxu0 0.0
    %298 = vmatprep.subr.mxu0 0.0
    %299 = vmatpush1.msra.mxu0 0.0
    %300 = vmatprep.subr.mxu0 0.0
    %301 = vmatpush1.msra.mxu0 0.0
    %302 = vmatprep.subr.mxu0 0.0
    %303 = vmatpush1.msra.mxu0 0.0
    %304 = vmatprep.subr.mxu0 0.0
    %305 = vmatpush1.msra.mxu0 0.0
    %306 = vmatprep.subr.mxu0 0.0
    %307 = vmatpush1.msra.mxu0 0.0
    %308 = vmatprep.subr.mxu0 0.0
    %309 = vmatpush1.msra.mxu0 0.0
    %310 = vmatprep.subr.mxu0 0.0
    %311 = vmatpush1.msra.mxu0 0.0
    %312 = vmatprep.subr.mxu0 0.0
    %313 = vmatpush1.msra.mxu0 0.0
    %314 = vmatprep.subr.mxu0 0.0
    %315 = vmatpush1.msra.mxu0 0.0
    %316 = vmatprep.subr.mxu0 0.0
    %317 = vmatpush1.msra.mxu0 0.0
    %318 = vmatprep.subr.mxu0 0.0
    %319 = vmatpush1.msra.mxu0 0.0
    %320 = vmatprep.subr.mxu0 0.0
    %321 = vmatpush1.msra.mxu0 0.0
    %322 = vmatprep.subr.mxu0 0.0
    %323 = vmatpush1.msra.mxu0 0.0
    %324 = vmatprep.subr.mxu0 0.0
    %325 = vmatpush1.msra.mxu0 0.0
    %326 = vmatprep.subr.mxu0 0.0
    %327 = vmatpush1.msra.mxu0 0.0
    %328 = vmatprep.subr.mxu0 0.0
    %329 = vmatpush1.msra.mxu0 0.0
    %330 = vmatprep.subr.mxu0 0.0
    %331 = vmatpush1.msra.mxu0 0.0
    %332 = vmatprep.mubr.f32.mxu0 0.0
    %333 = vmatmul.mubr.f32.gmra.mrb[0].mxu0 %v266
    %v334 = vpop.f32.mrb[0].mxu0
    %v335 = vadd.f32 %v236, %v334
    %v336 = vpop.f32.mrb[0].mxu0
    %337 = vdwg.mxu0
    %v338 = vxor.u32 %v335, 2147483648
    %v339 = vmul.f32 %v338, 1.442695
    %v340 = vpow.pop %v339
    %v341 = vadd.f32 %v340, 1.0
    %v342 = vrcp.pop %v341
    %v343 = vmul.f32 1.0, %v342
    %v344 = vtanh.pop %v335
    %v345 = vmul.f32 %v343, 0.0
    %347 = vrot.lane.b32.xlu0 %v344, 64
    %v348 = vpop.permute.xlu0 %347
    %v350 = vmul.f32 %v343, %v348
    %352 = vrot.lane.b32.xlu0 %v350, 32
    %v353 = vpop.permute.xlu0 %352
    %v355 = vadd.f32 %v345, %v353
    %v356 = vtanh.pop %v355
    %358 = vrot.lane.b32.xlu0 %v356, 64
    %v359 = vpop.permute.xlu0 %358
    %v361 = vmul.f32 %v343, %v359
    %362 = vmatprep.subr.mxu0 0.0
    %363 = vmatpush1.msra.mxu0 %v219
    %364 = vmatprep.subr.mxu0 0.0
    %365 = vmatpush1.msra.mxu0 %v220
    %366 = vmatprep.subr.mxu0 0.0
    %367 = vmatpush1.msra.mxu0 %v221
    %368 = vmatprep.subr.mxu0 0.0
    %369 = vmatpush1.msra.mxu0 %v222
    %370 = vmatprep.subr.mxu0 0.0
    %371 = vmatpush1.msra.mxu0 0.0
    %372 = vmatprep.subr.mxu0 0.0
    %373 = vmatpush1.msra.mxu0 0.0
    %374 = vmatprep.subr.mxu0 0.0
    %375 = vmatpush1.msra.mxu0 0.0
    %376 = vmatprep.subr.mxu0 0.0
    %377 = vmatpush1.msra.mxu0 0.0
    %378 = vmatprep.subr.mxu0 0.0
    %379 = vmatpush1.msra.mxu0 0.0
    %380 = vmatprep.subr.mxu0 0.0
    %381 = vmatpush1.msra.mxu0 0.0
    %382 = vmatprep.subr.mxu0 0.0
    %383 = vmatpush1.msra.mxu0 0.0
    %384 = vmatprep.subr.mxu0 0.0
    %385 = vmatpush1.msra.mxu0 0.0
    %386 = vmatprep.subr.mxu0 0.0
    %387 = vmatpush1.msra.mxu0 0.0
    %388 = vmatprep.subr.mxu0 0.0
    %389 = vmatpush1.msra.mxu0 0.0
    %390 = vmatprep.subr.mxu0 0.0
    %391 = vmatpush1.msra.mxu0 0.0
    %392 = vmatprep.subr.mxu0 0.0
    %393 = vmatpush1.msra.mxu0 0.0
    %394 = vmatprep.subr.mxu0 0.0
    %395 = vmatpush1.msra.mxu0 0.0
    %396 = vmatprep.subr.mxu0 0.0
    %397 = vmatpush1.msra.mxu0 0.0
    %398 = vmatprep.subr.mxu0 0.0
    %399 = vmatpush1.msra.mxu0 0.0
    %400 = vmatprep.subr.mxu0 0.0
    %401 = vmatpush1.msra.mxu0 0.0
    %402 = vmatprep.subr.mxu0 0.0
    %403 = vmatpush1.msra.mxu0 0.0
    %404 = vmatprep.subr.mxu0 0.0
    %405 = vmatpush1.msra.mxu0 0.0
    %406 = vmatprep.subr.mxu0 0.0
    %407 = vmatpush1.msra.mxu0 0.0
    %408 = vmatprep.subr.mxu0 0.0
    %409 = vmatpush1.msra.mxu0 0.0
    %410 = vmatprep.subr.mxu0 0.0
    %411 = vmatpush1.msra.mxu0 0.0
    %412 = vmatprep.subr.mxu0 0.0
    %413 = vmatpush1.msra.mxu0 0.0
    %414 = vmatprep.subr.mxu0 0.0
    %415 = vmatpush1.msra.mxu0 0.0
    %416 = vmatprep.subr.mxu0 0.0
    %417 = vmatpush1.msra.mxu0 0.0
    %418 = vmatprep.subr.mxu0 0.0
    %419 = vmatpush1.msra.mxu0 0.0
    %420 = vmatprep.subr.mxu0 0.0
    %421 = vmatpush1.msra.mxu0 0.0
    %422 = vmatprep.subr.mxu0 0.0
    %423 = vmatpush1.msra.mxu0 0.0
    %424 = vmatprep.subr.mxu0 0.0
    %425 = vmatpush1.msra.mxu0 0.0
    %426 = vmatprep.mubr.f32.mxu0 0.0
    %427 = vmatmul.mubr.f32.gmra.mrb[0].mxu0 %v266
    %v428 = vpop.f32.mrb[0].mxu0
    %v429 = vadd.f32 0.0, %v428
    %v430 = vpop.f32.mrb[0].mxu0
    %431 = vdwg.mxu0
    %v432 = vadd.f32 %v206, %v429
    %v433 = vxor.u32 %v432, 2147483648
    %v434 = vmul.f32 %v433, 1.442695
    %v435 = vpow.pop %v434
    %v436 = vadd.f32 %v435, 1.0
    %v437 = vrcp.pop %v436
    %v438 = vmul.f32 1.0, %v437
    %v439 = vtanh.pop %v432
    %v440 = vmul.f32 %v438, %v255
    %442 = vrot.lane.b32.xlu0 %v439, 64
    %v443 = vpop.permute.xlu0 %442
    %v445 = vmul.f32 %v438, %v443
    %447 = vrot.lane.b32.xlu0 %v445, 32
    %v448 = vpop.permute.xlu0 %447
    %v450 = vadd.f32 %v440, %v448
    %v451 = vtanh.pop %v450
    %453 = vrot.lane.b32.xlu0 %v451, 64
    %v454 = vpop.permute.xlu0 %453
    %v456 = vmul.f32 %v438, %v454
    %458 = vrot.lane.b32.xlu0 %v456, 32
    %v459 = vpop.permute.xlu0 %458
    %v460 = vsel %vm265, %v459, 0
    %462 = vmatprep.subr.mxu0 0.0
    %463 = vmatpush1.msra.mxu0 %v223
    %464 = vmatprep.subr.mxu0 0.0
    %465 = vmatpush1.msra.mxu0 %v224
    %466 = vmatprep.subr.mxu0 0.0
    %467 = vmatpush1.msra.mxu0 %v225
    %468 = vmatprep.subr.mxu0 0.0
    %469 = vmatpush1.msra.mxu0 %v226
    %470 = vmatprep.subr.mxu0 0.0
    %471 = vmatpush1.msra.mxu0 0.0
    %472 = vmatprep.subr.mxu0 0.0
    %473 = vmatpush1.msra.mxu0 0.0
    %474 = vmatprep.subr.mxu0 0.0
    %475 = vmatpush1.msra.mxu0 0.0
    %476 = vmatprep.subr.mxu0 0.0
    %477 = vmatpush1.msra.mxu0 0.0
    %478 = vmatprep.subr.mxu0 0.0
    %479 = vmatpush1.msra.mxu0 0.0
    %480 = vmatprep.subr.mxu0 0.0
    %481 = vmatpush1.msra.mxu0 0.0
    %482 = vmatprep.subr.mxu0 0.0
    %483 = vmatpush1.msra.mxu0 0.0
    %484 = vmatprep.subr.mxu0 0.0
    %485 = vmatpush1.msra.mxu0 0.0
    %486 = vmatprep.subr.mxu0 0.0
    %487 = vmatpush1.msra.mxu0 0.0
    %488 = vmatprep.subr.mxu0 0.0
    %489 = vmatpush1.msra.mxu0 0.0
    %490 = vmatprep.subr.mxu0 0.0
    %491 = vmatpush1.msra.mxu0 0.0
    %492 = vmatprep.subr.mxu0 0.0
    %493 = vmatpush1.msra.mxu0 0.0
    %494 = vmatprep.subr.mxu0 0.0
    %495 = vmatpush1.msra.mxu0 0.0
    %496 = vmatprep.subr.mxu0 0.0
    %497 = vmatpush1.msra.mxu0 0.0
    %498 = vmatprep.subr.mxu0 0.0
    %499 = vmatpush1.msra.mxu0 0.0
    %500 = vmatprep.subr.mxu0 0.0
    %501 = vmatpush1.msra.mxu0 0.0
    %502 = vmatprep.subr.mxu0 0.0
    %503 = vmatpush1.msra.mxu0 0.0
    %504 = vmatprep.subr.mxu0 0.0
    %505 = vmatpush1.msra.mxu0 0.0
    %506 = vmatprep.subr.mxu0 0.0
    %507 = vmatpush1.msra.mxu0 0.0
    %508 = vmatprep.subr.mxu0 0.0
    %509 = vmatpush1.msra.mxu0 0.0
    %510 = vmatprep.subr.mxu0 0.0
    %511 = vmatpush1.msra.mxu0 0.0
    %512 = vmatprep.subr.mxu0 0.0
    %513 = vmatpush1.msra.mxu0 0.0
    %514 = vmatprep.subr.mxu0 0.0
    %515 = vmatpush1.msra.mxu0 0.0
    %516 = vmatprep.subr.mxu0 0.0
    %517 = vmatpush1.msra.mxu0 0.0
    %518 = vmatprep.subr.mxu0 0.0
    %519 = vmatpush1.msra.mxu0 0.0
    %520 = vmatprep.subr.mxu0 0.0
    %521 = vmatpush1.msra.mxu0 0.0
    %522 = vmatprep.subr.mxu0 0.0
    %523 = vmatpush1.msra.mxu0 0.0
    %524 = vmatprep.subr.mxu0 0.0
    %525 = vmatpush1.msra.mxu0 0.0
    %526 = vmatprep.mubr.f32.mxu0 0.0
    %527 = vmatmul.mubr.f32.gmra.mrb[0].mxu0 %v460
    %v528 = vpop.f32.mrb[0].mxu0
    %v529 = vadd.f32 %v236, %v528
    %v530 = vpop.f32.mrb[0].mxu0
    %531 = vdwg.mxu0
    %533 = vrot.lane.b32.xlu0 %v361, 32
    %v534 = vpop.permute.xlu0 %533
    %v535 = vsel %vm265, %v534, 0
    %537 = vmatprep.subr.mxu0 0.0
    %538 = vmatpush1.msra.mxu0 %v227
    %539 = vmatprep.subr.mxu0 0.0
    %540 = vmatpush1.msra.mxu0 %v228
    %541 = vmatprep.subr.mxu0 0.0
    %542 = vmatpush1.msra.mxu0 %v229
    %543 = vmatprep.subr.mxu0 0.0
    %544 = vmatpush1.msra.mxu0 %v230
    %545 = vmatprep.subr.mxu0 0.0
    %546 = vmatpush1.msra.mxu0 0.0
    %547 = vmatprep.subr.mxu0 0.0
    %548 = vmatpush1.msra.mxu0 0.0
    %549 = vmatprep.subr.mxu0 0.0
    %550 = vmatpush1.msra.mxu0 0.0
    %551 = vmatprep.subr.mxu0 0.0
    %552 = vmatpush1.msra.mxu0 0.0
    %553 = vmatprep.subr.mxu0 0.0
    %554 = vmatpush1.msra.mxu0 0.0
    %555 = vmatprep.subr.mxu0 0.0
    %556 = vmatpush1.msra.mxu0 0.0
    %557 = vmatprep.subr.mxu0 0.0
    %558 = vmatpush1.msra.mxu0 0.0
    %559 = vmatprep.subr.mxu0 0.0
    %560 = vmatpush1.msra.mxu0 0.0
    %561 = vmatprep.subr.mxu0 0.0
    %562 = vmatpush1.msra.mxu0 0.0
    %563 = vmatprep.subr.mxu0 0.0
    %564 = vmatpush1.msra.mxu0 0.0
    %565 = vmatprep.subr.mxu0 0.0
    %566 = vmatpush1.msra.mxu0 0.0
    %567 = vmatprep.subr.mxu0 0.0
    %568 = vmatpush1.msra.mxu0 0.0
    %569 = vmatprep.subr.mxu0 0.0
    %570 = vmatpush1.msra.mxu0 0.0
    %571 = vmatprep.subr.mxu0 0.0
    %572 = vmatpush1.msra.mxu0 0.0
    %573 = vmatprep.subr.mxu0 0.0
    %574 = vmatpush1.msra.mxu0 0.0
    %575 = vmatprep.subr.mxu0 0.0
    %576 = vmatpush1.msra.mxu0 0.0
    %577 = vmatprep.subr.mxu0 0.0
    %578 = vmatpush1.msra.mxu0 0.0
    %579 = vmatprep.subr.mxu0 0.0
    %580 = vmatpush1.msra.mxu0 0.0
    %581 = vmatprep.subr.mxu0 0.0
    %582 = vmatpush1.msra.mxu0 0.0
    %583 = vmatprep.subr.mxu0 0.0
    %584 = vmatpush1.msra.mxu0 0.0
    %585 = vmatprep.subr.mxu0 0.0
    %586 = vmatpush1.msra.mxu0 0.0
    %587 = vmatprep.subr.mxu0 0.0
    %588 = vmatpush1.msra.mxu0 0.0
    %589 = vmatprep.subr.mxu0 0.0
    %590 = vmatpush1.msra.mxu0 0.0
    %591 = vmatprep.subr.mxu0 0.0
    %592 = vmatpush1.msra.mxu0 0.0
    %593 = vmatprep.subr.mxu0 0.0
    %594 = vmatpush1.msra.mxu0 0.0
    %595 = vmatprep.subr.mxu0 0.0
    %596 = vmatpush1.msra.mxu0 0.0
    %597 = vmatprep.subr.mxu0 0.0
    %598 = vmatpush1.msra.mxu0 0.0
    %599 = vmatprep.subr.mxu0 0.0
    %600 = vmatpush1.msra.mxu0 0.0
    %601 = vmatprep.mubr.f32.mxu0 0.0
    %602 = vmatmul.mubr.f32.gmra.mrb[0].mxu0 %v535
    %v603 = vpop.f32.mrb[0].mxu0
    %v604 = vadd.f32 0.0, %v603
    %v605 = vpop.f32.mrb[0].mxu0
    %606 = vdwg.mxu0
    %v607 = vadd.f32 %v529, %v604
    %v608 = vxor.u32 %v607, 2147483648
    %v609 = vmul.f32 %v608, 1.442695
    %v610 = vpow.pop %v609
    %v611 = vadd.f32 %v610, 1.0
    %v612 = vrcp.pop %v611
    %v613 = vmul.f32 1.0, %v612
    %v614 = vtanh.pop %v607
    %v615 = vmul.f32 %v613, %v355
    %617 = vrot.lane.b32.xlu0 %v614, 64
    %v618 = vpop.permute.xlu0 %617
    %v620 = vmul.f32 %v613, %v618
    %622 = vrot.lane.b32.xlu0 %v620, 32
    %v623 = vpop.permute.xlu0 %622
    %v625 = vadd.f32 %v615, %v623
    %v626 = vtanh.pop %v625
    %628 = vrot.lane.b32.xlu0 %v626, 64
    %v629 = vpop.permute.xlu0 %628
    %v631 = vmul.f32 %v613, %v629
    %632 = vmatprep.subr.mxu0 0.0
    %633 = vmatpush1.msra.mxu0 %v219
    %634 = vmatprep.subr.mxu0 0.0
    %635 = vmatpush1.msra.mxu0 %v220
    %636 = vmatprep.subr.mxu0 0.0
    %637 = vmatpush1.msra.mxu0 %v221
    %638 = vmatprep.subr.mxu0 0.0
    %639 = vmatpush1.msra.mxu0 %v222
    %640 = vmatprep.subr.mxu0 0.0
    %641 = vmatpush1.msra.mxu0 0.0
    %642 = vmatprep.subr.mxu0 0.0
    %643 = vmatpush1.msra.mxu0 0.0
    %644 = vmatprep.subr.mxu0 0.0
    %645 = vmatpush1.msra.mxu0 0.0
    %646 = vmatprep.subr.mxu0 0.0
    %647 = vmatpush1.msra.mxu0 0.0
    %648 = vmatprep.subr.mxu0 0.0
    %649 = vmatpush1.msra.mxu0 0.0
    %650 = vmatprep.subr.mxu0 0.0
    %651 = vmatpush1.msra.mxu0 0.0
    %652 = vmatprep.subr.mxu0 0.0
    %653 = vmatpush1.msra.mxu0 0.0
    %654 = vmatprep.subr.mxu0 0.0
    %655 = vmatpush1.msra.mxu0 0.0
    %656 = vmatprep.subr.mxu0 0.0
    %657 = vmatpush1.msra.mxu0 0.0
    %658 = vmatprep.subr.mxu0 0.0
    %659 = vmatpush1.msra.mxu0 0.0
    %660 = vmatprep.subr.mxu0 0.0
    %661 = vmatpush1.msra.mxu0 0.0
    %662 = vmatprep.subr.mxu0 0.0
    %663 = vmatpush1.msra.mxu0 0.0
    %664 = vmatprep.subr.mxu0 0.0
    %665 = vmatpush1.msra.mxu0 0.0
    %666 = vmatprep.subr.mxu0 0.0
    %667 = vmatpush1.msra.mxu0 0.0
    %668 = vmatprep.subr.mxu0 0.0
    %669 = vmatpush1.msra.mxu0 0.0
    %670 = vmatprep.subr.mxu0 0.0
    %671 = vmatpush1.msra.mxu0 0.0
    %672 = vmatprep.subr.mxu0 0.0
    %673 = vmatpush1.msra.mxu0 0.0
    %674 = vmatprep.subr.mxu0 0.0
    %675 = vmatpush1.msra.mxu0 0.0
    %676 = vmatprep.subr.mxu0 0.0
    %677 = vmatpush1.msra.mxu0 0.0
    %678 = vmatprep.subr.mxu0 0.0
    %679 = vmatpush1.msra.mxu0 0.0
    %680 = vmatprep.subr.mxu0 0.0
    %681 = vmatpush1.msra.mxu0 0.0
    %682 = vmatprep.subr.mxu0 0.0
    %683 = vmatpush1.msra.mxu0 0.0
    %684 = vmatprep.subr.mxu0 0.0
    %685 = vmatpush1.msra.mxu0 0.0
    %686 = vmatprep.subr.mxu0 0.0
    %687 = vmatpush1.msra.mxu0 0.0
    %688 = vmatprep.subr.mxu0 0.0
    %689 = vmatpush1.msra.mxu0 0.0
    %690 = vmatprep.subr.mxu0 0.0
    %691 = vmatpush1.msra.mxu0 0.0
    %692 = vmatprep.subr.mxu0 0.0
    %693 = vmatpush1.msra.mxu0 0.0
    %694 = vmatprep.subr.mxu0 0.0
    %695 = vmatpush1.msra.mxu0 0.0
    %696 = vmatprep.mubr.f32.mxu0 0.0
    %697 = vmatmul.mubr.f32.gmra.mrb[0].mxu0 %v460
    %v698 = vpop.f32.mrb[0].mxu0
    %v699 = vadd.f32 0.0, %v698
    %v700 = vpop.f32.mrb[0].mxu0
    %701 = vdwg.mxu0
    %v702 = vadd.f32 %v211, %v699
    %v703 = vxor.u32 %v702, 2147483648
    %v704 = vmul.f32 %v703, 1.442695
    %v705 = vpow.pop %v704
    %v706 = vadd.f32 %v705, 1.0
    %v707 = vrcp.pop %v706
    %v708 = vmul.f32 1.0, %v707
    %v709 = vtanh.pop %v702
    %v710 = vmul.f32 %v708, %v450
    %712 = vrot.lane.b32.xlu0 %v709, 64
    %v713 = vpop.permute.xlu0 %712
    %v715 = vmul.f32 %v708, %v713
    %717 = vrot.lane.b32.xlu0 %v715, 32
    %v718 = vpop.permute.xlu0 %717
    %v720 = vadd.f32 %v710, %v718
    %v721 = vtanh.pop %v720
    %723 = vrot.lane.b32.xlu0 %v721, 64
    %v724 = vpop.permute.xlu0 %723
    %v726 = vmul.f32 %v708, %v724
    %728 = vrot.lane.b32.xlu0 %v726, 32
    %v729 = vpop.permute.xlu0 %728
    %v730 = vsel %vm265, %v729, 0
    %732 = vmatprep.subr.mxu0 0.0
    %733 = vmatpush1.msra.mxu0 %v223
    %734 = vmatprep.subr.mxu0 0.0
    %735 = vmatpush1.msra.mxu0 %v224
    %736 = vmatprep.subr.mxu0 0.0
    %737 = vmatpush1.msra.mxu0 %v225
    %738 = vmatprep.subr.mxu0 0.0
    %739 = vmatpush1.msra.mxu0 %v226
    %740 = vmatprep.subr.mxu0 0.0
    %741 = vmatpush1.msra.mxu0 0.0
    %742 = vmatprep.subr.mxu0 0.0
    %743 = vmatpush1.msra.mxu0 0.0
    %744 = vmatprep.subr.mxu0 0.0
    %745 = vmatpush1.msra.mxu0 0.0
    %746 = vmatprep.subr.mxu0 0.0
    %747 = vmatpush1.msra.mxu0 0.0
    %748 = vmatprep.subr.mxu0 0.0
    %749 = vmatpush1.msra.mxu0 0.0
    %750 = vmatprep.subr.mxu0 0.0
    %751 = vmatpush1.msra.mxu0 0.0
    %752 = vmatprep.subr.mxu0 0.0
    %753 = vmatpush1.msra.mxu0 0.0
    %754 = vmatprep.subr.mxu0 0.0
    %755 = vmatpush1.msra.mxu0 0.0
    %756 = vmatprep.subr.mxu0 0.0
    %757 = vmatpush1.msra.mxu0 0.0
    %758 = vmatprep.subr.mxu0 0.0
    %759 = vmatpush1.msra.mxu0 0.0
    %760 = vmatprep.subr.mxu0 0.0
    %761 = vmatpush1.msra.mxu0 0.0
    %762 = vmatprep.subr.mxu0 0.0
    %763 = vmatpush1.msra.mxu0 0.0
    %764 = vmatprep.subr.mxu0 0.0
    %765 = vmatpush1.msra.mxu0 0.0
    %766 = vmatprep.subr.mxu0 0.0
    %767 = vmatpush1.msra.mxu0 0.0
    %768 = vmatprep.subr.mxu0 0.0
    %769 = vmatpush1.msra.mxu0 0.0
    %770 = vmatprep.subr.mxu0 0.0
    %771 = vmatpush1.msra.mxu0 0.0
    %772 = vmatprep.subr.mxu0 0.0
    %773 = vmatpush1.msra.mxu0 0.0
    %774 = vmatprep.subr.mxu0 0.0
    %775 = vmatpush1.msra.mxu0 0.0
    %776 = vmatprep.subr.mxu0 0.0
    %777 = vmatpush1.msra.mxu0 0.0
    %778 = vmatprep.subr.mxu0 0.0
    %779 = vmatpush1.msra.mxu0 0.0
    %780 = vmatprep.subr.mxu0 0.0
    %781 = vmatpush1.msra.mxu0 0.0
    %782 = vmatprep.subr.mxu0 0.0
    %783 = vmatpush1.msra.mxu0 0.0
    %784 = vmatprep.subr.mxu0 0.0
    %785 = vmatpush1.msra.mxu0 0.0
    %786 = vmatprep.subr.mxu0 0.0
    %787 = vmatpush1.msra.mxu0 0.0
    %788 = vmatprep.subr.mxu0 0.0
    %789 = vmatpush1.msra.mxu0 0.0
    %790 = vmatprep.subr.mxu0 0.0
    %791 = vmatpush1.msra.mxu0 0.0
    %792 = vmatprep.subr.mxu0 0.0
    %793 = vmatpush1.msra.mxu0 0.0
    %794 = vmatprep.subr.mxu0 0.0
    %795 = vmatpush1.msra.mxu0 0.0
    %796 = vmatprep.mubr.f32.mxu0 0.0
    %797 = vmatmul.mubr.f32.gmra.mrb[0].mxu0 %v730
    %v798 = vpop.f32.mrb[0].mxu0
    %v799 = vadd.f32 %v236, %v798
    %v800 = vpop.f32.mrb[0].mxu0
    %801 = vdwg.mxu0
    %803 = vrot.lane.b32.xlu0 %v631, 32
    %v804 = vpop.permute.xlu0 %803
    %v805 = vsel %vm265, %v804, 0
    %807 = vmatprep.subr.mxu0 0.0
    %808 = vmatpush1.msra.mxu0 %v227
    %809 = vmatprep.subr.mxu0 0.0
    %810 = vmatpush1.msra.mxu0 %v228
    %811 = vmatprep.subr.mxu0 0.0
    %812 = vmatpush1.msra.mxu0 %v229
    %813 = vmatprep.subr.mxu0 0.0
    %814 = vmatpush1.msra.mxu0 %v230
    %815 = vmatprep.subr.mxu0 0.0
    %816 = vmatpush1.msra.mxu0 0.0
    %817 = vmatprep.subr.mxu0 0.0
    %818 = vmatpush1.msra.mxu0 0.0
    %819 = vmatprep.subr.mxu0 0.0
    %820 = vmatpush1.msra.mxu0 0.0
    %821 = vmatprep.subr.mxu0 0.0
    %822 = vmatpush1.msra.mxu0 0.0
    %823 = vmatprep.subr.mxu0 0.0
    %824 = vmatpush1.msra.mxu0 0.0
    %825 = vmatprep.subr.mxu0 0.0
    %826 = vmatpush1.msra.mxu0 0.0
    %827 = vmatprep.subr.mxu0 0.0
    %828 = vmatpush1.msra.mxu0 0.0
    %829 = vmatprep.subr.mxu0 0.0
    %830 = vmatpush1.msra.mxu0 0.0
    %831 = vmatprep.subr.mxu0 0.0
    %832 = vmatpush1.msra.mxu0 0.0
    %833 = vmatprep.subr.mxu0 0.0
    %834 = vmatpush1.msra.mxu0 0.0
    %835 = vmatprep.subr.mxu0 0.0
    %836 = vmatpush1.msra.mxu0 0.0
    %837 = vmatprep.subr.mxu0 0.0
    %838 = vmatpush1.msra.mxu0 0.0
    %839 = vmatprep.subr.mxu0 0.0
    %840 = vmatpush1.msra.mxu0 0.0
    %841 = vmatprep.subr.mxu0 0.0
    %842 = vmatpush1.msra.mxu0 0.0
    %843 = vmatprep.subr.mxu0 0.0
    %844 = vmatpush1.msra.mxu0 0.0
    %845 = vmatprep.subr.mxu0 0.0
    %846 = vmatpush1.msra.mxu0 0.0
    %847 = vmatprep.subr.mxu0 0.0
    %848 = vmatpush1.msra.mxu0 0.0
    %849 = vmatprep.subr.mxu0 0.0
    %850 = vmatpush1.msra.mxu0 0.0
    %851 = vmatprep.subr.mxu0 0.0
    %852 = vmatpush1.msra.mxu0 0.0
    %853 = vmatprep.subr.mxu0 0.0
    %854 = vmatpush1.msra.mxu0 0.0
    %855 = vmatprep.subr.mxu0 0.0
    %856 = vmatpush1.msra.mxu0 0.0
    %857 = vmatprep.subr.mxu0 0.0
    %858 = vmatpush1.msra.mxu0 0.0
    %859 = vmatprep.subr.mxu0 0.0
    %860 = vmatpush1.msra.mxu0 0.0
    %861 = vmatprep.subr.mxu0 0.0
    %862 = vmatpush1.msra.mxu0 0.0
    %863 = vmatprep.subr.mxu0 0.0
    %864 = vmatpush1.msra.mxu0 0.0
    %865 = vmatprep.subr.mxu0 0.0
    %866 = vmatpush1.msra.mxu0 0.0
    %867 = vmatprep.subr.mxu0 0.0
    %868 = vmatpush1.msra.mxu0 0.0
    %869 = vmatprep.subr.mxu0 0.0
    %870 = vmatpush1.msra.mxu0 0.0
    %871 = vmatprep.mubr.f32.mxu0 0.0
    %872 = vmatmul.mubr.f32.gmra.mrb[0].mxu0 %v805
    %v873 = vpop.f32.mrb[0].mxu0
    %v874 = vadd.f32 0.0, %v873
    %v875 = vpop.f32.mrb[0].mxu0
    %876 = vdwg.mxu0
    %v877 = vadd.f32 %v799, %v874
    %v878 = vxor.u32 %v877, 2147483648
    %v879 = vmul.f32 %v878, 1.442695
    %v880 = vpow.pop %v879
    %v881 = vadd.f32 %v880, 1.0
    %v882 = vrcp.pop %v881
    %v883 = vmul.f32 1.0, %v882
    %v884 = vtanh.pop %v877
    %v885 = vmul.f32 %v883, %v625
    %887 = vrot.lane.b32.xlu0 %v884, 64
    %v888 = vpop.permute.xlu0 %887
    %v890 = vmul.f32 %v883, %v888
    %892 = vrot.lane.b32.xlu0 %v890, 32
    %v893 = vpop.permute.xlu0 %892
    %v895 = vadd.f32 %v885, %v893
    %v896 = vtanh.pop %v895
    %898 = vrot.lane.b32.xlu0 %v896, 64
    %v899 = vpop.permute.xlu0 %898
    %v901 = vmul.f32 %v883, %v899
    %902 = vmatprep.subr.mxu0 0.0
    %903 = vmatpush1.msra.mxu0 %v219
    %904 = vmatprep.subr.mxu0 0.0
    %905 = vmatpush1.msra.mxu0 %v220
    %906 = vmatprep.subr.mxu0 0.0
    %907 = vmatpush1.msra.mxu0 %v221
    %908 = vmatprep.subr.mxu0 0.0
    %909 = vmatpush1.msra.mxu0 %v222
    %910 = vmatprep.subr.mxu0 0.0
    %911 = vmatpush1.msra.mxu0 0.0
    %912 = vmatprep.subr.mxu0 0.0
    %913 = vmatpush1.msra.mxu0 0.0
    %914 = vmatprep.subr.mxu0 0.0
    %915 = vmatpush1.msra.mxu0 0.0
    %916 = vmatprep.subr.mxu0 0.0
    %917 = vmatpush1.msra.mxu0 0.0
    %918 = vmatprep.subr.mxu0 0.0
    %919 = vmatpush1.msra.mxu0 0.0
    %920 = vmatprep.subr.mxu0 0.0
    %921 = vmatpush1.msra.mxu0 0.0
    %922 = vmatprep.subr.mxu0 0.0
    %923 = vmatpush1.msra.mxu0 0.0
    %924 = vmatprep.subr.mxu0 0.0
    %925 = vmatpush1.msra.mxu0 0.0
    %926 = vmatprep.subr.mxu0 0.0
    %927 = vmatpush1.msra.mxu0 0.0
    %928 = vmatprep.subr.mxu0 0.0
    %929 = vmatpush1.msra.mxu0 0.0
    %930 = vmatprep.subr.mxu0 0.0
    %931 = vmatpush1.msra.mxu0 0.0
    %932 = vmatprep.subr.mxu0 0.0
    %933 = vmatpush1.msra.mxu0 0.0
    %934 = vmatprep.subr.mxu0 0.0
    %935 = vmatpush1.msra.mxu0 0.0
    %936 = vmatprep.subr.mxu0 0.0
    %937 = vmatpush1.msra.mxu0 0.0
    %938 = vmatprep.subr.mxu0 0.0
    %939 = vmatpush1.msra.mxu0 0.0
    %940 = vmatprep.subr.mxu0 0.0
    %941 = vmatpush1.msra.mxu0 0.0
    %942 = vmatprep.subr.mxu0 0.0
    %943 = vmatpush1.msra.mxu0 0.0
    %944 = vmatprep.subr.mxu0 0.0
    %945 = vmatpush1.msra.mxu0 0.0
    %946 = vmatprep.subr.mxu0 0.0
    %947 = vmatpush1.msra.mxu0 0.0
    %948 = vmatprep.subr.mxu0 0.0
    %949 = vmatpush1.msra.mxu0 0.0
    %950 = vmatprep.subr.mxu0 0.0
    %951 = vmatpush1.msra.mxu0 0.0
    %952 = vmatprep.subr.mxu0 0.0
    %953 = vmatpush1.msra.mxu0 0.0
    %954 = vmatprep.subr.mxu0 0.0
    %955 = vmatpush1.msra.mxu0 0.0
    %956 = vmatprep.subr.mxu0 0.0
    %957 = vmatpush1.msra.mxu0 0.0
    %958 = vmatprep.subr.mxu0 0.0
    %959 = vmatpush1.msra.mxu0 0.0
    %960 = vmatprep.subr.mxu0 0.0
    %961 = vmatpush1.msra.mxu0 0.0
    %962 = vmatprep.subr.mxu0 0.0
    %963 = vmatpush1.msra.mxu0 0.0
    %964 = vmatprep.subr.mxu0 0.0
    %965 = vmatpush1.msra.mxu0 0.0
    %966 = vmatprep.mubr.f32.mxu0 0.0
    %967 = vmatmul.mubr.f32.gmra.mrb[0].mxu0 %v730
    %v968 = vpop.f32.mrb[0].mxu0
    %v969 = vadd.f32 0.0, %v968
    %v970 = vpop.f32.mrb[0].mxu0
    %971 = vdwg.mxu0
    %v972 = vadd.f32 %v216, %v969
    %v973 = vxor.u32 %v972, 2147483648
    %v974 = vmul.f32 %v973, 1.442695
    %v975 = vpow.pop %v974
    %v976 = vadd.f32 %v975, 1.0
    %v977 = vrcp.pop %v976
    %v978 = vmul.f32 1.0, %v977
    %v979 = vtanh.pop %v972
    %v980 = vmul.f32 %v978, %v720
    %982 = vrot.lane.b32.xlu0 %v979, 64
    %v983 = vpop.permute.xlu0 %982
    %v985 = vmul.f32 %v978, %v983
    %987 = vrot.lane.b32.xlu0 %v985, 32
    %v988 = vpop.permute.xlu0 %987
    %v990 = vadd.f32 %v980, %v988
    %v991 = vtanh.pop %v990
    %993 = vrot.lane.b32.xlu0 %v991, 64
    %v994 = vpop.permute.xlu0 %993
    %v996 = vmul.f32 %v978, %v994
    %998 = vrot.lane.b32.xlu0 %v996, 32
    %v999 = vpop.permute.xlu0 %998
    %v1000 = vsel %vm265, %v999, 0
    %1002 = vmatprep.subr.mxu0 0.0
    %1003 = vmatpush1.msra.mxu0 %v223
    %1004 = vmatprep.subr.mxu0 0.0
    %1005 = vmatpush1.msra.mxu0 %v224
    %1006 = vmatprep.subr.mxu0 0.0
    %1007 = vmatpush1.msra.mxu0 %v225
    %1008 = vmatprep.subr.mxu0 0.0
    %1009 = vmatpush1.msra.mxu0 %v226
    %1010 = vmatprep.subr.mxu0 0.0
    %1011 = vmatpush1.msra.mxu0 0.0
    %1012 = vmatprep.subr.mxu0 0.0
    %1013 = vmatpush1.msra.mxu0 0.0
    %1014 = vmatprep.subr.mxu0 0.0
    %1015 = vmatpush1.msra.mxu0 0.0
    %1016 = vmatprep.subr.mxu0 0.0
    %1017 = vmatpush1.msra.mxu0 0.0
    %1018 = vmatprep.subr.mxu0 0.0
    %1019 = vmatpush1.msra.mxu0 0.0
    %1020 = vmatprep.subr.mxu0 0.0
    %1021 = vmatpush1.msra.mxu0 0.0
    %1022 = vmatprep.subr.mxu0 0.0
    %1023 = vmatpush1.msra.mxu0 0.0
    %1024 = vmatprep.subr.mxu0 0.0
    %1025 = vmatpush1.msra.mxu0 0.0
    %1026 = vmatprep.subr.mxu0 0.0
    %1027 = vmatpush1.msra.mxu0 0.0
    %1028 = vmatprep.subr.mxu0 0.0
    %1029 = vmatpush1.msra.mxu0 0.0
    %1030 = vmatprep.subr.mxu0 0.0
    %1031 = vmatpush1.msra.mxu0 0.0
    %1032 = vmatprep.subr.mxu0 0.0
    %1033 = vmatpush1.msra.mxu0 0.0
    %1034 = vmatprep.subr.mxu0 0.0
    %1035 = vmatpush1.msra.mxu0 0.0
    %1036 = vmatprep.subr.mxu0 0.0
    %1037 = vmatpush1.msra.mxu0 0.0
    %1038 = vmatprep.subr.mxu0 0.0
    %1039 = vmatpush1.msra.mxu0 0.0
    %1040 = vmatprep.subr.mxu0 0.0
    %1041 = vmatpush1.msra.mxu0 0.0
    %1042 = vmatprep.subr.mxu0 0.0
    %1043 = vmatpush1.msra.mxu0 0.0
    %1044 = vmatprep.subr.mxu0 0.0
    %1045 = vmatpush1.msra.mxu0 0.0
    %1046 = vmatprep.subr.mxu0 0.0
    %1047 = vmatpush1.msra.mxu0 0.0
    %1048 = vmatprep.subr.mxu0 0.0
    %1049 = vmatpush1.msra.mxu0 0.0
    %1050 = vmatprep.subr.mxu0 0.0
    %1051 = vmatpush1.msra.mxu0 0.0
    %1052 = vmatprep.subr.mxu0 0.0
    %1053 = vmatpush1.msra.mxu0 0.0
    %1054 = vmatprep.subr.mxu0 0.0
    %1055 = vmatpush1.msra.mxu0 0.0
    %1056 = vmatprep.subr.mxu0 0.0
    %1057 = vmatpush1.msra.mxu0 0.0
    %1058 = vmatprep.subr.mxu0 0.0
    %1059 = vmatpush1.msra.mxu0 0.0
    %1060 = vmatprep.subr.mxu0 0.0
    %1061 = vmatpush1.msra.mxu0 0.0
    %1062 = vmatprep.subr.mxu0 0.0
    %1063 = vmatpush1.msra.mxu0 0.0
    %1064 = vmatprep.subr.mxu0 0.0
    %1065 = vmatpush1.msra.mxu0 0.0
    %1066 = vmatprep.mubr.f32.mxu0 0.0
    %1067 = vmatmul.mubr.f32.gmra.mrb[0].mxu0 %v1000
    %v1068 = vpop.f32.mrb[0].mxu0
    %v1069 = vadd.f32 %v236, %v1068
    %v1070 = vpop.f32.mrb[0].mxu0
    %1071 = vdwg.mxu0
    %1073 = vrot.lane.b32.xlu0 %v901, 32
    %v1074 = vpop.permute.xlu0 %1073
    %v1075 = vsel %vm265, %v1074, 0
    %1077 = vmatprep.subr.mxu0 0.0
    %1078 = vmatpush1.msra.mxu0 %v227
    %1079 = vmatprep.subr.mxu0 0.0
    %1080 = vmatpush1.msra.mxu0 %v228
    %1081 = vmatprep.subr.mxu0 0.0
    %1082 = vmatpush1.msra.mxu0 %v229
    %1083 = vmatprep.subr.mxu0 0.0
    %1084 = vmatpush1.msra.mxu0 %v230
    %1085 = vmatprep.subr.mxu0 0.0
    %1086 = vmatpush1.msra.mxu0 0.0
    %1087 = vmatprep.subr.mxu0 0.0
    %1088 = vmatpush1.msra.mxu0 0.0
    %1089 = vmatprep.subr.mxu0 0.0
    %1090 = vmatpush1.msra.mxu0 0.0
    %1091 = vmatprep.subr.mxu0 0.0
    %1092 = vmatpush1.msra.mxu0 0.0
    %1093 = vmatprep.subr.mxu0 0.0
    %1094 = vmatpush1.msra.mxu0 0.0
    %1095 = vmatprep.subr.mxu0 0.0
    %1096 = vmatpush1.msra.mxu0 0.0
    %1097 = vmatprep.subr.mxu0 0.0
    %1098 = vmatpush1.msra.mxu0 0.0
    %1099 = vmatprep.subr.mxu0 0.0
    %1100 = vmatpush1.msra.mxu0 0.0
    %1101 = vmatprep.subr.mxu0 0.0
    %1102 = vmatpush1.msra.mxu0 0.0
    %1103 = vmatprep.subr.mxu0 0.0
    %1104 = vmatpush1.msra.mxu0 0.0
    %1105 = vmatprep.subr.mxu0 0.0
    %1106 = vmatpush1.msra.mxu0 0.0
    %1107 = vmatprep.subr.mxu0 0.0
    %1108 = vmatpush1.msra.mxu0 0.0
    %1109 = vmatprep.subr.mxu0 0.0
    %1110 = vmatpush1.msra.mxu0 0.0
    %1111 = vmatprep.subr.mxu0 0.0
    %1112 = vmatpush1.msra.mxu0 0.0
    %1113 = vmatprep.subr.mxu0 0.0
    %1114 = vmatpush1.msra.mxu0 0.0
    %1115 = vmatprep.subr.mxu0 0.0
    %1116 = vmatpush1.msra.mxu0 0.0
    %1117 = vmatprep.subr.mxu0 0.0
    %1118 = vmatpush1.msra.mxu0 0.0
    %1119 = vmatprep.subr.mxu0 0.0
    %1120 = vmatpush1.msra.mxu0 0.0
    %1121 = vmatprep.subr.mxu0 0.0
    %1122 = vmatpush1.msra.mxu0 0.0
    %1123 = vmatprep.subr.mxu0 0.0
    %1124 = vmatpush1.msra.mxu0 0.0
    %1125 = vmatprep.subr.mxu0 0.0
    %1126 = vmatpush1.msra.mxu0 0.0
    %1127 = vmatprep.subr.mxu0 0.0
    %1128 = vmatpush1.msra.mxu0 0.0
    %1129 = vmatprep.subr.mxu0 0.0
    %1130 = vmatpush1.msra.mxu0 0.0
    %1131 = vmatprep.subr.mxu0 0.0
    %1132 = vmatpush1.msra.mxu0 0.0
    %1133 = vmatprep.subr.mxu0 0.0
    %1134 = vmatpush1.msra.mxu0 0.0
    %1135 = vmatprep.subr.mxu0 0.0
    %1136 = vmatpush1.msra.mxu0 0.0
    %1137 = vmatprep.subr.mxu0 0.0
    %1138 = vmatpush1.msra.mxu0 0.0
    %1139 = vmatprep.subr.mxu0 0.0
    %1140 = vmatpush1.msra.mxu0 0.0
    %1141 = vmatprep.mubr.f32.mxu0 0.0
    %1142 = vmatmul.mubr.f32.gmra.mrb[0].mxu0 %v1075
    %v1143 = vpop.f32.mrb[0].mxu0
    %v1144 = vadd.f32 0.0, %v1143
    %v1145 = vpop.f32.mrb[0].mxu0
    %1146 = vdwg.mxu0
    %v1147 = vadd.f32 %v1069, %v1144
    %v1148 = vxor.u32 %v1147, 2147483648
    %v1149 = vmul.f32 %v1148, 1.442695
    %v1150 = vpow.pop %v1149
    %v1151 = vadd.f32 %v1150, 1.0
    %v1152 = vrcp.pop %v1151
    %v1153 = vmul.f32 1.0, %v1152
    %v1154 = vtanh.pop %v1147
    %v1155 = vmul.f32 %v1153, %v895
    %1157 = vrot.lane.b32.xlu0 %v1154, 64
    %v1158 = vpop.permute.xlu0 %1157
    %v1160 = vmul.f32 %v1153, %v1158
    %1162 = vrot.lane.b32.xlu0 %v1160, 32
    %v1163 = vpop.permute.xlu0 %1162
    %v1165 = vadd.f32 %v1155, %v1163
    %v1166 = vtanh.pop %v1165
    %1168 = vrot.lane.b32.xlu0 %v1166, 64
    %v1169 = vpop.permute.xlu0 %1168
    %v1171 = vmul.f32 %v1153, %v1169
    %v1172 = vld [vmem:[%s7] sm:$0xff]
    %v1173 = vld [vmem:[%s7 + $0x8] sm:$0xff]
    %v1174 = vld [vmem:[%s7 + $0x10] sm:$0xff]
    %v1175 = vld [vmem:[%s7 + $0x18] sm:$0xff]
    %v1176 = vld [vmem:[#allocation10] sm:$0x1]
    %v1178 = vlaneseq
    %v1179 = vshrl.u32 %v1178, 7
    %v1180 = vsub.s32 0, %v1179
    %v1181 = vrot.slane %v1176, %v1180
    %v1184 = vrot.slane %v1171, 4
    %1185 = vrot.lane.b32.xlu0 %v1184, 32
    %v1186 = vpop.permute.xlu0 %1185
    %v1187 = vsel %vm265, %v1186, 0
    %1189 = vmatprep.subr.mxu0 0.0
    %1190 = vmatpush1.msra.mxu0 %v1172
    %1191 = vmatprep.subr.mxu0 0.0
    %1192 = vmatpush1.msra.mxu0 %v1173
    %1193 = vmatprep.subr.mxu0 0.0
    %1194 = vmatpush1.msra.mxu0 %v1174
    %1195 = vmatprep.subr.mxu0 0.0
    %1196 = vmatpush1.msra.mxu0 %v1175
    %1197 = vmatprep.subr.mxu0 0.0
    %1198 = vmatpush1.msra.mxu0 0.0
    %1199 = vmatprep.subr.mxu0 0.0
    %1200 = vmatpush1.msra.mxu0 0.0
    %1201 = vmatprep.subr.mxu0 0.0
    %1202 = vmatpush1.msra.mxu0 0.0
    %1203 = vmatprep.subr.mxu0 0.0
    %1204 = vmatpush1.msra.mxu0 0.0
    %1205 = vmatprep.subr.mxu0 0.0
    %1206 = vmatpush1.msra.mxu0 0.0
    %1207 = vmatprep.subr.mxu0 0.0
    %1208 = vmatpush1.msra.mxu0 0.0
    %1209 = vmatprep.subr.mxu0 0.0
    %1210 = vmatpush1.msra.mxu0 0.0
    %1211 = vmatprep.subr.mxu0 0.0
    %1212 = vmatpush1.msra.mxu0 0.0
    %1213 = vmatprep.subr.mxu0 0.0
    %1214 = vmatpush1.msra.mxu0 0.0
    %1215 = vmatprep.subr.mxu0 0.0
    %1216 = vmatpush1.msra.mxu0 0.0
    %1217 = vmatprep.subr.mxu0 0.0
    %1218 = vmatpush1.msra.mxu0 0.0
    %1219 = vmatprep.subr.mxu0 0.0
    %1220 = vmatpush1.msra.mxu0 0.0
    %1221 = vmatprep.subr.mxu0 0.0
    %1222 = vmatpush1.msra.mxu0 0.0
    %1223 = vmatprep.subr.mxu0 0.0
    %1224 = vmatpush1.msra.mxu0 0.0
    %1225 = vmatprep.subr.mxu0 0.0
    %1226 = vmatpush1.msra.mxu0 0.0
    %1227 = vmatprep.subr.mxu0 0.0
    %1228 = vmatpush1.msra.mxu0 0.0
    %1229 = vmatprep.subr.mxu0 0.0
    %1230 = vmatpush1.msra.mxu0 0.0
    %1231 = vmatprep.subr.mxu0 0.0
    %1232 = vmatpush1.msra.mxu0 0.0
    %1233 = vmatprep.subr.mxu0 0.0
    %1234 = vmatpush1.msra.mxu0 0.0
    %1235 = vmatprep.subr.mxu0 0.0
    %1236 = vmatpush1.msra.mxu0 0.0
    %1237 = vmatprep.subr.mxu0 0.0
    %1238 = vmatpush1.msra.mxu0 0.0
    %1239 = vmatprep.subr.mxu0 0.0
    %1240 = vmatpush1.msra.mxu0 0.0
    %1241 = vmatprep.subr.mxu0 0.0
    %1242 = vmatpush1.msra.mxu0 0.0
    %1243 = vmatprep.subr.mxu0 0.0
    %1244 = vmatpush1.msra.mxu0 0.0
    %1245 = vmatprep.subr.mxu0 0.0
    %1246 = vmatpush1.msra.mxu0 0.0
    %1247 = vmatprep.subr.mxu0 0.0
    %1248 = vmatpush1.msra.mxu0 0.0
    %1249 = vmatprep.subr.mxu0 0.0
    %1250 = vmatpush1.msra.mxu0 0.0
    %1251 = vmatprep.subr.mxu0 0.0
    %1252 = vmatpush1.msra.mxu0 0.0
    %1253 = vmatprep.mubr.f32.mxu0 0.0
    %1254 = vmatmul.mubr.f32.gmra.mrb[0].mxu0 %v1187
    %v1255 = vpop.f32.mrb[0].mxu0
    %v1256 = vadd.f32 %v1181, %v1255
    %v1257 = vpop.f32.mrb[0].mxu0
    %1258 = vdwg.mxu0
    %vm1259 = vcmask 11264
    %1260 = vst.msk [vmem:[%s9] sm:$0xf] %vm1259, %v1256
    // Predicated region
    $region62: #{lstm_predictor_forward.1} parent=1 // pred_check
      _
    $region63: #{lstm_predictor_forward.1} parent=1 // pred_check_branch
      %1262 = sbr.rel (0) target = $region65
    $region64: #{lstm_predictor_forward.1} parent=1 // pred_region
      _
    $region65: #{lstm_predictor_forward.1} parent=1 // pred_fallthru
      _
    // Predicated region
    $region66: #{lstm_predictor_forward.1} parent=1 // pred_check
      _
    $region67: #{lstm_predictor_forward.1} parent=1 // pred_check_branch
      %1264 = sbr.rel (0) target = $region69
    $region68: #{lstm_predictor_forward.1} parent=1 // pred_region
      _
    $region69: #{lstm_predictor_forward.1} parent=1 // pred_fallthru
      _
    %1265 = vsyncpa [#allocation3], 1
    %1266 = vsyncpa [#allocation5], 1
    %1267 = vsyncpa [#allocation8], 1
    %1268 = vsyncpa [#allocation11], 1

</llo_original>
